<compile_context>
chip_gen: v7x
topology: tpu7x:2x2x1
jax: 0.10.0
libtpu: 0.0.40
codegen_flags: <defaults>
</compile_context>

<pallas_src>
import functools

import jax
import jax.numpy as jnp
from jax.experimental import pallas as pl
from jax.experimental.pallas import tpu as pltpu


def _round_up(x, m):
    return (x + m - 1) // m * m


def _conv_bn_prelu_kernel(x_ref, w_ref, scale_ref, shift_ref, alpha_ref,
                          o_ref, *,
                          kh_size, kw_size, th, wp, w_out, c_in, c_out_pad,
                          stride, dilation, apply_prelu):
    # x_ref:     (1, Hp, Wp, Cin)          padded bf16 image (resident per batch)
    # w_ref:     (KH*KW, Cin, Cout_pad)    bf16 weight slab
    # scale/shift/alpha_ref: (1, Cout_pad) f32
    # o_ref:     (1, TH, W_out, Cout_pad)  one output row-tile
    sh, sw = stride
    dh, dw = dilation

    ht = pl.program_id(1)
    row0 = ht * (th * sh)       # first padded-input row needed by this tile

    # f32 accumulator held in vregs; written back to VMEM exactly once.
    acc = jnp.zeros((th * w_out, c_out_pad), jnp.float32)

    tap = 0
    for kh in range(kh_size):
        h_start = row0 + kh * dh
        if sh == 1 and sw == 1:
            # Common case: read each tap window straight from the resident
            # ref — no intermediate band copy, no value-level slicing.
            for kw in range(kw_size):
                w0 = kw * dw
                patch = x_ref[:, pl.ds(h_start, th), pl.ds(w0, w_out), :]
                acc = acc + jnp.dot(patch.reshape(th * w_out, c_in),
                                    w_ref[tap],
                                    preferred_element_type=jnp.float32)
                tap += 1
        else:
            # Strided conv: H decimation at the ref read, W decimation via a
            # strided value slice of the band.
            h_idx = pl.ds(h_start, th) if sh == 1 else pl.ds(h_start, th, sh)
            band = x_ref[:, h_idx, :, :].reshape(th, wp, c_in)
            for kw in range(kw_size):
                w0 = kw * dw
                patch = jax.lax.slice(
                    band,
                    (0, w0, 0),
                    (th, w0 + (w_out - 1) * sw + 1, c_in),
                    (1, sw, 1),
                )                                            # (TH, W_out, Cin)
                acc = acc + jnp.dot(patch.reshape(th * w_out, c_in),
                                    w_ref[tap],
                                    preferred_element_type=jnp.float32)
                tap += 1

    # Per-channel affine (inference BatchNorm and/or conv bias), then PReLU.
    y = acc * scale_ref[...] + shift_ref[...]
    if apply_prelu:
        y = jnp.where(y >= 0.0, y, alpha_ref[...] * y)
    o_ref[...] = y.reshape(1, th, w_out, c_out_pad).astype(o_ref.dtype)


def conv_forward(x_nchw, weight_oihw, *, stride, padding, dilation=(1, 1),
                 groups=1, bias=None, bn_acti=False,
                 bn_gamma=None, bn_beta=None, bn_mean=None, bn_var=None,
                 bn_eps=1e-3, prelu_alpha=None):
    """Pallas implementation of Conv.forward (PyTorch NCHW in / NCHW out)."""
    assert groups == 1, "TODO(synk): grouped conv not implemented"
    if isinstance(stride, int):
        stride = (stride, stride)
    if isinstance(padding, int):
        padding = (padding, padding)
    if isinstance(dilation, int):
        dilation = (dilation, dilation)

    n, c_in, h, w = x_nchw.shape
    c_out, c_in_w, kh, kw = weight_oihw.shape
    assert c_in_w == c_in
    ph, pw = padding
    sh, sw = stride
    dh, dw = dilation
    h_out = (h + 2 * ph - dh * (kh - 1) - 1) // sh + 1
    w_out = (w + 2 * pw - dw * (kw - 1) - 1) // sw + 1
    out_dtype = x_nchw.dtype

    # Lane-dense channel padding for the output (sliced off afterwards).
    c_out_pad = _round_up(c_out, 128)

    # Output-row tile: prefer ~8-32 rows per grid step (must divide H_out);
    # th=8 with w_out=16 gives an MXU-friendly M = 128.
    th = h_out
    for cand in (8, 16, 32, 4, 2, 1):
        if h_out % cand == 0:
            th = cand
            break
    n_ht = h_out // th

    # ---- glue (plain XLA): layout + zero padding + bf16 cast ----------------
    x_nhwc = jnp.transpose(x_nchw, (0, 2, 3, 1)).astype(jnp.bfloat16)
    x_pad = jnp.pad(x_nhwc, ((0, 0), (ph, ph), (pw, pw), (0, 0)))
    hp, wp = x_pad.shape[1], x_pad.shape[2]

    # (Cout, Cin, KH, KW) -> (KH*KW, Cin, Cout_pad) contiguous bf16 slab.
    w_slab = jnp.transpose(weight_oihw, (2, 3, 1, 0)).reshape(kh * kw, c_in, c_out)
    w_slab = jnp.pad(w_slab, ((0, 0), (0, 0), (0, c_out_pad - c_out)))
    w_slab = w_slab.astype(jnp.bfloat16)

    # Per-channel affine (eval-mode BN + optional conv bias) and PReLU alpha.
    if bn_acti:
        scale = bn_gamma / jnp.sqrt(bn_var + bn_eps)
        shift = bn_beta - bn_mean * scale
        alpha = jnp.broadcast_to(
            jnp.asarray(prelu_alpha, jnp.float32).reshape(-1), (c_out,))
    else:
        scale = jnp.ones((c_out,), jnp.float32)
        shift = jnp.zeros((c_out,), jnp.float32)
        alpha = jnp.zeros((c_out,), jnp.float32)
    if bias is not None:
        shift = shift + scale * jnp.asarray(bias, jnp.float32)  # bias applied pre-BN
    pad_c = (0, c_out_pad - c_out)
    scale = jnp.pad(scale.astype(jnp.float32), pad_c).reshape(1, c_out_pad)
    shift = jnp.pad(shift.astype(jnp.float32), pad_c).reshape(1, c_out_pad)
    alpha = jnp.pad(alpha.astype(jnp.float32), pad_c).reshape(1, c_out_pad)

    kernel = functools.partial(
        _conv_bn_prelu_kernel,
        kh_size=kh, kw_size=kw, th=th, wp=wp, w_out=w_out,
        c_in=c_in, c_out_pad=c_out_pad,
        stride=(sh, sw), dilation=(dh, dw), apply_prelu=bn_acti)

    flops = 2 * n * h_out * w_out * kh * kw * c_in * c_out
    bytes_accessed = (int(x_pad.size) * 2 + int(w_slab.size) * 2
                      + n * h_out * w_out * c_out_pad * 4)

    out_nhwc = pl.pallas_call(
        kernel,
        out_shape=jax.ShapeDtypeStruct((n, h_out, w_out, c_out_pad), out_dtype),
        grid_spec=pltpu.PrefetchScalarGridSpec(
            num_scalar_prefetch=0,
            grid=(n, n_ht),
            in_specs=[
                # Whole padded image per batch element; the block index is
                # constant in the H-tile axis so it stays VMEM-resident and is
                # DMA'd only once per image.
                pl.BlockSpec((1, hp, wp, c_in), lambda b, t: (b, 0, 0, 0)),
                pl.BlockSpec((kh * kw, c_in, c_out_pad), lambda b, t: (0, 0, 0)),
                pl.BlockSpec((1, c_out_pad), lambda b, t: (0, 0)),
                pl.BlockSpec((1, c_out_pad), lambda b, t: (0, 0)),
                pl.BlockSpec((1, c_out_pad), lambda b, t: (0, 0)),
            ],
            out_specs=pl.BlockSpec((1, th, w_out, c_out_pad),
                                   lambda b, t: (b, t, 0, 0)),
        ),
        compiler_params=pltpu.CompilerParams(
            dimension_semantics=("parallel", "parallel"),
            vmem_limit_bytes=32 * 1024 * 1024),
        cost_estimate=pl.CostEstimate(
            flops=flops, transcendentals=0, bytes_accessed=bytes_accessed),
    )(x_pad, w_slab, scale, shift, alpha)

    # Drop channel padding, NHWC -> NCHW to match PyTorch output convention.
    return jnp.transpose(out_nhwc[..., :c_out], (0, 3, 1, 2))


if __name__ == "__main__":
    # Module instance: Conv(nIn=4, nOut=8, kSize=3, stride=1, padding=1,
    #                       bn_acti=True, bias=False)
    key = jax.random.PRNGKey(0)
    k_x, k_w = jax.random.split(key)

    N, C_IN, H, W = 2, 4, 16, 16
    C_OUT, K = 8, 3

    x = jax.random.normal(k_x, (N, C_IN, H, W), dtype=jnp.float32)
    weight = 0.1 * jax.random.normal(k_w, (C_OUT, C_IN, K, K), dtype=jnp.float32)

    # BatchNorm2d / PReLU default initialization (fresh module, eval-mode stats).
    bn_gamma = jnp.ones((C_OUT,), jnp.float32)
    bn_beta = jnp.zeros((C_OUT,), jnp.float32)
    bn_mean = jnp.zeros((C_OUT,), jnp.float32)
    bn_var = jnp.ones((C_OUT,), jnp.float32)
    prelu_alpha = jnp.full((C_OUT,), 0.25, jnp.float32)

    out = conv_forward(
        x, weight, stride=1, padding=1, dilation=(1, 1), groups=1,
        bias=None, bn_acti=True, bn_gamma=bn_gamma, bn_beta=bn_beta,
        bn_mean=bn_mean, bn_var=bn_var, bn_eps=1e-3,
        prelu_alpha=prelu_alpha)
    out = jax.block_until_ready(out)

    # Reference: XLA conv + eval-mode BN + PReLU on the same bf16-rounded
    # inputs the kernel consumes (accumulation stays f32 in both paths).
    x_r = x.astype(jnp.bfloat16).astype(jnp.float32)
    w_r = weight.astype(jnp.bfloat16).astype(jnp.float32)
    ref = jax.lax.conv_general_dilated(
        x_r, w_r, window_strides=(1, 1), padding=((1, 1), (1, 1)),
        rhs_dilation=(1, 1),
        dimension_numbers=("NCHW", "OIHW", "NCHW"),
        precision=jax.lax.Precision.HIGHEST)
    bn_scale = (bn_gamma / jnp.sqrt(bn_var + 1e-3)).reshape(1, C_OUT, 1, 1)
    bn_shift = (bn_beta - bn_mean * (bn_gamma / jnp.sqrt(bn_var + 1e-3))
                ).reshape(1, C_OUT, 1, 1)
    ref = ref * bn_scale + bn_shift
    ref = jnp.where(ref >= 0, ref, prelu_alpha.reshape(1, C_OUT, 1, 1) * ref)

    assert out.shape == (N, C_OUT, H, W), out.shape
    max_err = float(jnp.abs(out - ref).max())
    assert jnp.allclose(out, ref, atol=2e-3, rtol=2e-3), max_err
    print("KERNEL_OK")
</pallas_src>

<mosaic_0001>
module attributes {stable_mosaic.version = 11 : i64} {
  func.func @_conv_bn_prelu_kernel(%arg0: i32, %arg1: i32, %arg2: memref<1x18x18x4xbf16, #tpu.memory_space<vmem>>, %arg3: memref<9x4x128xbf16, #tpu.memory_space<vmem>>, %arg4: memref<1x128xf32, #tpu.memory_space<vmem>>, %arg5: memref<1x128xf32, #tpu.memory_space<vmem>>, %arg6: memref<1x128xf32, #tpu.memory_space<vmem>>, %arg7: memref<1x8x16x128xf32, #tpu.memory_space<vmem>>) attributes {dimension_semantics = [#tpu.dimension_semantics<parallel>, #tpu.dimension_semantics<parallel>], iteration_bounds = array<i64: 2, 2>, scalar_prefetch = 0 : i64, scratch_operands = 0 : i64, tpu.core_type = #tpu.core_type<tc>, window_params = [{transform_indices = @transform_0, window_bounds = array<i64: 1, 18, 18, 4>}, {pipeline_mode = #tpu.pipeline_mode<synchronous>, transform_indices = @transform_1, window_bounds = array<i64: 9, 4, 128>}, {pipeline_mode = #tpu.pipeline_mode<synchronous>, transform_indices = @transform_2, window_bounds = array<i64: 1, 128>}, {pipeline_mode = #tpu.pipeline_mode<synchronous>, transform_indices = @transform_3, window_bounds = array<i64: 1, 128>}, {pipeline_mode = #tpu.pipeline_mode<synchronous>, transform_indices = @transform_4, window_bounds = array<i64: 1, 128>}, {transform_indices = @transform_5, window_bounds = array<i64: 1, 8, 16, 128>}]} {
    %c8_i32 = arith.constant 8 : i32
    %0 = arith.muli %arg1, %c8_i32 : i32
    %cst = arith.constant 0.000000e+00 : f32
    %1 = vector.broadcast %cst : f32 to vector<128x128xf32>
    %c0_i32 = arith.constant 0 : i32
    %2 = arith.addi %0, %c0_i32 : i32
    %c0 = arith.constant 0 : index
    %3 = arith.index_cast %2 : i32 to index
    %c0_0 = arith.constant 0 : index
    %c0_1 = arith.constant 0 : index
    %4 = vector.load %arg2[%c0, %3, %c0_0, %c0_1] : memref<1x18x18x4xbf16, #tpu.memory_space<vmem>>, vector<1x8x16x4xbf16>
    %5 = vector.shape_cast %4 : vector<1x8x16x4xbf16> to vector<128x4xbf16>
    %c0_2 = arith.constant 0 : index
    %c0_3 = arith.constant 0 : index
    %c0_4 = arith.constant 0 : index
    %6 = vector.load %arg3[%c0_2, %c0_3, %c0_4] : memref<9x4x128xbf16, #tpu.memory_space<vmem>>, vector<1x4x128xbf16>
    %7 = vector.shape_cast %6 : vector<1x4x128xbf16> to vector<4x128xbf16>
    %cst_5 = arith.constant dense<0.000000e+00> : vector<128x128xf32>
    %8 = tpu.matmul %5, %7, %cst_5 {dimension_numbers = #tpu.dot_dimension_numbers<[1], [0], [0], [1], [0, 0, 1, 1], [], []>} : vector<128x4xbf16>, vector<4x128xbf16>, vector<128x128xf32> -> vector<128x128xf32>
    %9 = arith.addf %1, %8 : vector<128x128xf32>
    %c0_6 = arith.constant 0 : index
    %10 = arith.index_cast %2 : i32 to index
    %c1 = arith.constant 1 : index
    %c0_7 = arith.constant 0 : index
    %11 = vector.load %arg2[%c0_6, %10, %c1, %c0_7] : memref<1x18x18x4xbf16, #tpu.memory_space<vmem>>, vector<1x8x16x4xbf16>
    %12 = vector.shape_cast %11 : vector<1x8x16x4xbf16> to vector<128x4xbf16>
    %c1_8 = arith.constant 1 : index
    %c0_9 = arith.constant 0 : index
    %c0_10 = arith.constant 0 : index
    %13 = vector.load %arg3[%c1_8, %c0_9, %c0_10] : memref<9x4x128xbf16, #tpu.memory_space<vmem>>, vector<1x4x128xbf16>
    %14 = vector.shape_cast %13 : vector<1x4x128xbf16> to vector<4x128xbf16>
    %cst_11 = arith.constant dense<0.000000e+00> : vector<128x128xf32>
    %15 = tpu.matmul %12, %14, %cst_11 {dimension_numbers = #tpu.dot_dimension_numbers<[1], [0], [0], [1], [0, 0, 1, 1], [], []>} : vector<128x4xbf16>, vector<4x128xbf16>, vector<128x128xf32> -> vector<128x128xf32>
    %16 = arith.addf %9, %15 : vector<128x128xf32>
    %c0_12 = arith.constant 0 : index
    %17 = arith.index_cast %2 : i32 to index
    %c2 = arith.constant 2 : index
    %c0_13 = arith.constant 0 : index
    %18 = vector.load %arg2[%c0_12, %17, %c2, %c0_13] : memref<1x18x18x4xbf16, #tpu.memory_space<vmem>>, vector<1x8x16x4xbf16>
    %19 = vector.shape_cast %18 : vector<1x8x16x4xbf16> to vector<128x4xbf16>
    %c2_14 = arith.constant 2 : index
    %c0_15 = arith.constant 0 : index
    %c0_16 = arith.constant 0 : index
    %20 = vector.load %arg3[%c2_14, %c0_15, %c0_16] : memref<9x4x128xbf16, #tpu.memory_space<vmem>>, vector<1x4x128xbf16>
    %21 = vector.shape_cast %20 : vector<1x4x128xbf16> to vector<4x128xbf16>
    %cst_17 = arith.constant dense<0.000000e+00> : vector<128x128xf32>
    %22 = tpu.matmul %19, %21, %cst_17 {dimension_numbers = #tpu.dot_dimension_numbers<[1], [0], [0], [1], [0, 0, 1, 1], [], []>} : vector<128x4xbf16>, vector<4x128xbf16>, vector<128x128xf32> -> vector<128x128xf32>
    %23 = arith.addf %16, %22 : vector<128x128xf32>
    %c1_i32 = arith.constant 1 : i32
    %24 = arith.addi %0, %c1_i32 : i32
    %c0_18 = arith.constant 0 : index
    %25 = arith.index_cast %24 : i32 to index
    %c0_19 = arith.constant 0 : index
    %c0_20 = arith.constant 0 : index
    %26 = vector.load %arg2[%c0_18, %25, %c0_19, %c0_20] : memref<1x18x18x4xbf16, #tpu.memory_space<vmem>>, vector<1x8x16x4xbf16>
    %27 = vector.shape_cast %26 : vector<1x8x16x4xbf16> to vector<128x4xbf16>
    %c3 = arith.constant 3 : index
    %c0_21 = arith.constant 0 : index
    %c0_22 = arith.constant 0 : index
    %28 = vector.load %arg3[%c3, %c0_21, %c0_22] : memref<9x4x128xbf16, #tpu.memory_space<vmem>>, vector<1x4x128xbf16>
    %29 = vector.shape_cast %28 : vector<1x4x128xbf16> to vector<4x128xbf16>
    %cst_23 = arith.constant dense<0.000000e+00> : vector<128x128xf32>
    %30 = tpu.matmul %27, %29, %cst_23 {dimension_numbers = #tpu.dot_dimension_numbers<[1], [0], [0], [1], [0, 0, 1, 1], [], []>} : vector<128x4xbf16>, vector<4x128xbf16>, vector<128x128xf32> -> vector<128x128xf32>
    %31 = arith.addf %23, %30 : vector<128x128xf32>
    %c0_24 = arith.constant 0 : index
    %32 = arith.index_cast %24 : i32 to index
    %c1_25 = arith.constant 1 : index
    %c0_26 = arith.constant 0 : index
    %33 = vector.load %arg2[%c0_24, %32, %c1_25, %c0_26] : memref<1x18x18x4xbf16, #tpu.memory_space<vmem>>, vector<1x8x16x4xbf16>
    %34 = vector.shape_cast %33 : vector<1x8x16x4xbf16> to vector<128x4xbf16>
    %c4 = arith.constant 4 : index
    %c0_27 = arith.constant 0 : index
    %c0_28 = arith.constant 0 : index
    %35 = vector.load %arg3[%c4, %c0_27, %c0_28] : memref<9x4x128xbf16, #tpu.memory_space<vmem>>, vector<1x4x128xbf16>
    %36 = vector.shape_cast %35 : vector<1x4x128xbf16> to vector<4x128xbf16>
    %cst_29 = arith.constant dense<0.000000e+00> : vector<128x128xf32>
    %37 = tpu.matmul %34, %36, %cst_29 {dimension_numbers = #tpu.dot_dimension_numbers<[1], [0], [0], [1], [0, 0, 1, 1], [], []>} : vector<128x4xbf16>, vector<4x128xbf16>, vector<128x128xf32> -> vector<128x128xf32>
    %38 = arith.addf %31, %37 : vector<128x128xf32>
    %c0_30 = arith.constant 0 : index
    %39 = arith.index_cast %24 : i32 to index
    %c2_31 = arith.constant 2 : index
    %c0_32 = arith.constant 0 : index
    %40 = vector.load %arg2[%c0_30, %39, %c2_31, %c0_32] : memref<1x18x18x4xbf16, #tpu.memory_space<vmem>>, vector<1x8x16x4xbf16>
    %41 = vector.shape_cast %40 : vector<1x8x16x4xbf16> to vector<128x4xbf16>
    %c5 = arith.constant 5 : index
    %c0_33 = arith.constant 0 : index
    %c0_34 = arith.constant 0 : index
    %42 = vector.load %arg3[%c5, %c0_33, %c0_34] : memref<9x4x128xbf16, #tpu.memory_space<vmem>>, vector<1x4x128xbf16>
    %43 = vector.shape_cast %42 : vector<1x4x128xbf16> to vector<4x128xbf16>
    %cst_35 = arith.constant dense<0.000000e+00> : vector<128x128xf32>
    %44 = tpu.matmul %41, %43, %cst_35 {dimension_numbers = #tpu.dot_dimension_numbers<[1], [0], [0], [1], [0, 0, 1, 1], [], []>} : vector<128x4xbf16>, vector<4x128xbf16>, vector<128x128xf32> -> vector<128x128xf32>
    %45 = arith.addf %38, %44 : vector<128x128xf32>
    %c2_i32 = arith.constant 2 : i32
    %46 = arith.addi %0, %c2_i32 : i32
    %c0_36 = arith.constant 0 : index
    %47 = arith.index_cast %46 : i32 to index
    %c0_37 = arith.constant 0 : index
    %c0_38 = arith.constant 0 : index
    %48 = vector.load %arg2[%c0_36, %47, %c0_37, %c0_38] : memref<1x18x18x4xbf16, #tpu.memory_space<vmem>>, vector<1x8x16x4xbf16>
    %49 = vector.shape_cast %48 : vector<1x8x16x4xbf16> to vector<128x4xbf16>
    %c6 = arith.constant 6 : index
    %c0_39 = arith.constant 0 : index
    %c0_40 = arith.constant 0 : index
    %50 = vector.load %arg3[%c6, %c0_39, %c0_40] : memref<9x4x128xbf16, #tpu.memory_space<vmem>>, vector<1x4x128xbf16>
    %51 = vector.shape_cast %50 : vector<1x4x128xbf16> to vector<4x128xbf16>
    %cst_41 = arith.constant dense<0.000000e+00> : vector<128x128xf32>
    %52 = tpu.matmul %49, %51, %cst_41 {dimension_numbers = #tpu.dot_dimension_numbers<[1], [0], [0], [1], [0, 0, 1, 1], [], []>} : vector<128x4xbf16>, vector<4x128xbf16>, vector<128x128xf32> -> vector<128x128xf32>
    %53 = arith.addf %45, %52 : vector<128x128xf32>
    %c0_42 = arith.constant 0 : index
    %54 = arith.index_cast %46 : i32 to index
    %c1_43 = arith.constant 1 : index
    %c0_44 = arith.constant 0 : index
    %55 = vector.load %arg2[%c0_42, %54, %c1_43, %c0_44] : memref<1x18x18x4xbf16, #tpu.memory_space<vmem>>, vector<1x8x16x4xbf16>
    %56 = vector.shape_cast %55 : vector<1x8x16x4xbf16> to vector<128x4xbf16>
    %c7 = arith.constant 7 : index
    %c0_45 = arith.constant 0 : index
    %c0_46 = arith.constant 0 : index
    %57 = vector.load %arg3[%c7, %c0_45, %c0_46] : memref<9x4x128xbf16, #tpu.memory_space<vmem>>, vector<1x4x128xbf16>
    %58 = vector.shape_cast %57 : vector<1x4x128xbf16> to vector<4x128xbf16>
    %cst_47 = arith.constant dense<0.000000e+00> : vector<128x128xf32>
    %59 = tpu.matmul %56, %58, %cst_47 {dimension_numbers = #tpu.dot_dimension_numbers<[1], [0], [0], [1], [0, 0, 1, 1], [], []>} : vector<128x4xbf16>, vector<4x128xbf16>, vector<128x128xf32> -> vector<128x128xf32>
    %60 = arith.addf %53, %59 : vector<128x128xf32>
    %c0_48 = arith.constant 0 : index
    %61 = arith.index_cast %46 : i32 to index
    %c2_49 = arith.constant 2 : index
    %c0_50 = arith.constant 0 : index
    %62 = vector.load %arg2[%c0_48, %61, %c2_49, %c0_50] : memref<1x18x18x4xbf16, #tpu.memory_space<vmem>>, vector<1x8x16x4xbf16>
    %63 = vector.shape_cast %62 : vector<1x8x16x4xbf16> to vector<128x4xbf16>
    %c8 = arith.constant 8 : index
    %c0_51 = arith.constant 0 : index
    %c0_52 = arith.constant 0 : index
    %64 = vector.load %arg3[%c8, %c0_51, %c0_52] : memref<9x4x128xbf16, #tpu.memory_space<vmem>>, vector<1x4x128xbf16>
    %65 = vector.shape_cast %64 : vector<1x4x128xbf16> to vector<4x128xbf16>
    %cst_53 = arith.constant dense<0.000000e+00> : vector<128x128xf32>
    %66 = tpu.matmul %63, %65, %cst_53 {dimension_numbers = #tpu.dot_dimension_numbers<[1], [0], [0], [1], [0, 0, 1, 1], [], []>} : vector<128x4xbf16>, vector<4x128xbf16>, vector<128x128xf32> -> vector<128x128xf32>
    %67 = arith.addf %60, %66 : vector<128x128xf32>
    %c0_54 = arith.constant 0 : index
    %c0_55 = arith.constant 0 : index
    %68 = vector.load %arg4[%c0_54, %c0_55] : memref<1x128xf32, #tpu.memory_space<vmem>>, vector<1x128xf32>
    %69 = vector.broadcast %68 : vector<1x128xf32> to vector<128x128xf32>
    %70 = arith.mulf %67, %69 : vector<128x128xf32>
    %c0_56 = arith.constant 0 : index
    %c0_57 = arith.constant 0 : index
    %71 = vector.load %arg5[%c0_56, %c0_57] : memref<1x128xf32, #tpu.memory_space<vmem>>, vector<1x128xf32>
    %72 = vector.broadcast %71 : vector<1x128xf32> to vector<128x128xf32>
    %73 = arith.addf %70, %72 : vector<128x128xf32>
    %cst_58 = arith.constant 0.000000e+00 : f32
    %74 = vector.broadcast %cst_58 : f32 to vector<128x128xf32>
    %75 = arith.cmpf oge, %73, %74 : vector<128x128xf32>
    %c0_59 = arith.constant 0 : index
    %c0_60 = arith.constant 0 : index
    %76 = vector.load %arg6[%c0_59, %c0_60] : memref<1x128xf32, #tpu.memory_space<vmem>>, vector<1x128xf32>
    %77 = vector.broadcast %76 : vector<1x128xf32> to vector<128x128xf32>
    %78 = arith.mulf %77, %73 : vector<128x128xf32>
    %79 = arith.select %75, %73, %78 : vector<128x128xi1>, vector<128x128xf32>
    %80 = vector.shape_cast %79 : vector<128x128xf32> to vector<1x8x16x128xf32>
    %c0_61 = arith.constant 0 : index
    %c0_62 = arith.constant 0 : index
    %c0_63 = arith.constant 0 : index
    %c0_64 = arith.constant 0 : index
    %81 = vector.load %arg7[%c0_61, %c0_62, %c0_63, %c0_64] : memref<1x8x16x128xf32, #tpu.memory_space<vmem>>, vector<1x8x16x128xf32>
    tpu.vector_store %arg7[%c0_61, %c0_62, %c0_63, %c0_64], %80 {strides = array<i32>} : memref<1x8x16x128xf32, #tpu.memory_space<vmem>>, vector<1x8x16x128xf32>,
    return
  }
  func.func @transform_0(%arg0: i32, %arg1: i32) -> (i32, i32, i32, i32) {
    %c0_i32 = arith.constant 0 : i32
    %c0_i32_0 = arith.constant 0 : i32
    %c0_i32_1 = arith.constant 0 : i32
    %c0_i32_2 = arith.constant 0 : i32
    return %arg0, %c0_i32, %c0_i32_0, %c0_i32_1 : i32, i32, i32, i32
  }
  func.func @transform_1(%arg0: i32, %arg1: i32) -> (i32, i32, i32) {
    %c0_i32 = arith.constant 0 : i32
    %c0_i32_0 = arith.constant 0 : i32
    %c0_i32_1 = arith.constant 0 : i32
    %c0_i32_2 = arith.constant 0 : i32
    return %c0_i32, %c0_i32_0, %c0_i32_1 : i32, i32, i32
  }
  func.func @transform_2(%arg0: i32, %arg1: i32) -> (i32, i32) {
    %c0_i32 = arith.constant 0 : i32
    %c0_i32_0 = arith.constant 0 : i32
    %c0_i32_1 = arith.constant 0 : i32
    return %c0_i32, %c0_i32_0 : i32, i32
  }
  func.func @transform_3(%arg0: i32, %arg1: i32) -> (i32, i32) {
    %c0_i32 = arith.constant 0 : i32
    %c0_i32_0 = arith.constant 0 : i32
    %c0_i32_1 = arith.constant 0 : i32
    return %c0_i32, %c0_i32_0 : i32, i32
  }
  func.func @transform_4(%arg0: i32, %arg1: i32) -> (i32, i32) {
    %c0_i32 = arith.constant 0 : i32
    %c0_i32_0 = arith.constant 0 : i32
    %c0_i32_1 = arith.constant 0 : i32
    return %c0_i32, %c0_i32_0 : i32, i32
  }
  func.func @transform_5(%arg0: i32, %arg1: i32) -> (i32, i32, i32, i32) {
    %c0_i32 = arith.constant 0 : i32
    %c0_i32_0 = arith.constant 0 : i32
    %c0_i32_1 = arith.constant 0 : i32
    return %arg0, %arg1, %c0_i32, %c0_i32_0 : i32, i32, i32, i32
  }
}

</mosaic_0001>

<llo_original>
// kernel: tpu_custom_call.1
$region0: #{tpu_custom_call.1}
  #allocation0 [shape = 'u32[]', space=smem, size = 0x4, offset = 0x4, fixed_abs, tag = 'smem constant byte address 0x4 - core index']
  #allocation1 [shape = 'u32[144,128]{1,0:T(1,128)}', space=vmem, size = 0x12000, scoped, tag = 'internal scratch']
  %s0 = inlined_call_operand.vmem [shape: bf16[2,18,18,4], index: 0, kind: input, shape index: {}]
  %s1 = inlined_call_operand.vmem [shape: bf16[9,4,128], index: 1, kind: input, shape index: {}]
  %s2 = inlined_call_operand.vmem [shape: f32[1,128], index: 2, kind: input, shape index: {}]
  %s3 = inlined_call_operand.vmem [shape: f32[1,128], index: 3, kind: input, shape index: {}]
  %s4 = inlined_call_operand.vmem [shape: f32[1,128], index: 4, kind: input, shape index: {}]
  %s5 = inlined_call_operand.hbm [shape: f32[2,16,16,128], index: 5, kind: output, shape index: {}]
  %s6 = sld [smem:[#allocation0]]
  $region53: #{tpu_custom_call.1} parent=0
    _
  %s8 = ssub.s32 1, %s6
  %s9 = scalar_select 0, %s8, %s6
  $region1: #{tpu_custom_call.1} parent=0
    #allocation2 [shape = 'u8[131072]{0}', space=vmem, size = 0x20000, scoped, tag = 'output window, operand 0']
    #allocation3 [shape = 's32[2]{0}', space=sflag, size = 0x8, scoped, tag = 'scoped memory for tpu_custom_call.1']
    %10 = vsyncpa [#allocation3], 0
    %s11 = scalar_lea.sflag [#allocation3], 1
    %12 = vsyncpa %s11, 0
    loop: start=0, step=1, limit=6
    $region2: #{tpu_custom_call.1} parent=1 // loop_pre_header
      _
    $region3: #{tpu_custom_call.1} parent=1 // loop_header
      %s14 = sphi 0, %s18
      %p15 = scmp.ge.s32.totalorder %s14, 6
      %s21 = sphi 0, %s33
      %s22 = sphi 0, %s29
      %s23 = sphi 0, %s21
      %s24 = sphi 0, %s22
      %s25 = sphi 0, %s23
      %s26 = sphi 0, %s24
      %s36 = sphi 0, %s38
      %s39 = sphi 0, %s36
      %s40 = sphi 0, %s39
      %s56 = sphi 0, %s40
      %s60 = sphi 0, %s60
      %s62 = sphi 0, %s60
      %s63 = sphi 0, %s62
      %s77 = sphi 0, %s63
      %s81 = sphi 0, %s81
      %s83 = sphi 0, %s81
      %s84 = sphi 0, %s83
      %s98 = sphi 0, %s84
      %s102 = sphi 0, %s102
      %s104 = sphi 0, %s102
      %s105 = sphi 0, %s104
      %s119 = sphi 0, %s105
      %s123 = sphi 0, %s123
      %s125 = sphi 0, %s123
      %s126 = sphi 0, %s125
      %s140 = sphi 0, %s126
      %s148 = sphi 0, %s150
      %s151 = sphi 0, %s148
      %s152 = sphi 0, %s151
      %s168 = sphi 0, %s152
    $region4: #{tpu_custom_call.1} parent=1 // loop_header_branch
      %17 = sbr.rel (%p15) target = $region8
    $region5: #{tpu_custom_call.1} parent=1 // loop_body
      %s19 = ssub.s32 %s14, 1
      %s20 = ssub.s32 %s14, 2
      %s27 = sadd.s32 1, %s22
      %p28 = scmp.ge.s32.totalorder %s27, 2
      %s29 = scalar_select %p28, 0, %s27
      %s30 = sadd.s32 1, %s21
      %s31 = scalar_select %p28, %s30, %s21
      %p32 = scmp.ge.s32.totalorder %s31, 2
      %s33 = scalar_select %p32, 0, %s31
      %s34 = ssub.s32 %s21, %s33
      %p35 = scmp.eq.s32.totalorder %s34, 0
      %s37 = sadd.s32 %s36, 1
      %s38 = scalar_select %p35, %s36, %s37
      %p41 = pneg %p35
      %p42 = scmp.eq.s32.totalorder %s14, 3
      %p43 = por %p41, %p42
      %p44 = scmp.ne.s32.totalorder %s36, %s39
      %p45 = scmp.eq.s32.totalorder %s14, 0
      %p46 = por %p44, %p45
      %p47 = scmp.ne.s32.totalorder %s36, %s39
      %p48 = scmp.eq.s32.totalorder %s19, 3
      %p49 = por %p47, %p48
      %p50 = scmp.ne.s32.totalorder %s39, %s40
      %p51 = scmp.eq.s32.totalorder %s19, 0
      %p52 = por %p50, %p51
      %p53 = scmp.ne.s32.totalorder %s39, %s40
      %p54 = scmp.eq.s32.totalorder %s20, 3
      %p55 = por %p53, %p54
      %p57 = scmp.ne.s32.totalorder %s40, %s56
      %p58 = scmp.eq.s32.totalorder %s20, 0
      %p59 = por %p57, %p58
      %s61 = sadd.s32 %s60, 1
      %p64 = scmp.eq.s32.totalorder %s14, 3
      %p65 = scmp.ne.s32.totalorder %s60, %s62
      %p66 = scmp.eq.s32.totalorder %s14, 0
      %p67 = por %p65, %p66
      %p68 = scmp.ne.s32.totalorder %s60, %s62
      %p69 = scmp.eq.s32.totalorder %s19, 3
      %p70 = por %p68, %p69
      %p71 = scmp.ne.s32.totalorder %s62, %s63
      %p72 = scmp.eq.s32.totalorder %s19, 0
      %p73 = por %p71, %p72
      %p74 = scmp.ne.s32.totalorder %s62, %s63
      %p75 = scmp.eq.s32.totalorder %s20, 3
      %p76 = por %p74, %p75
      %p78 = scmp.ne.s32.totalorder %s63, %s77
      %p79 = scmp.eq.s32.totalorder %s20, 0
      %p80 = por %p78, %p79
      %s82 = sadd.s32 %s81, 1
      %p85 = scmp.eq.s32.totalorder %s14, 3
      %p86 = scmp.ne.s32.totalorder %s81, %s83
      %p87 = scmp.eq.s32.totalorder %s14, 0
      %p88 = por %p86, %p87
      %p89 = scmp.ne.s32.totalorder %s81, %s83
      %p90 = scmp.eq.s32.totalorder %s19, 3
      %p91 = por %p89, %p90
      %p92 = scmp.ne.s32.totalorder %s83, %s84
      %p93 = scmp.eq.s32.totalorder %s19, 0
      %p94 = por %p92, %p93
      %p95 = scmp.ne.s32.totalorder %s83, %s84
      %p96 = scmp.eq.s32.totalorder %s20, 3
      %p97 = por %p95, %p96
      %p99 = scmp.ne.s32.totalorder %s84, %s98
      %p100 = scmp.eq.s32.totalorder %s20, 0
      %p101 = por %p99, %p100
      %s103 = sadd.s32 %s102, 1
      %p106 = scmp.eq.s32.totalorder %s14, 3
      %p107 = scmp.ne.s32.totalorder %s102, %s104
      %p108 = scmp.eq.s32.totalorder %s14, 0
      %p109 = por %p107, %p108
      %p110 = scmp.ne.s32.totalorder %s102, %s104
      %p111 = scmp.eq.s32.totalorder %s19, 3
      %p112 = por %p110, %p111
      %p113 = scmp.ne.s32.totalorder %s104, %s105
      %p114 = scmp.eq.s32.totalorder %s19, 0
      %p115 = por %p113, %p114
      %p116 = scmp.ne.s32.totalorder %s104, %s105
      %p117 = scmp.eq.s32.totalorder %s20, 3
      %p118 = por %p116, %p117
      %p120 = scmp.ne.s32.totalorder %s105, %s119
      %p121 = scmp.eq.s32.totalorder %s20, 0
      %p122 = por %p120, %p121
      %s124 = sadd.s32 %s123, 1
      %p127 = scmp.eq.s32.totalorder %s14, 3
      %p128 = scmp.ne.s32.totalorder %s123, %s125
      %p129 = scmp.eq.s32.totalorder %s14, 0
      %p130 = por %p128, %p129
      %p131 = scmp.ne.s32.totalorder %s123, %s125
      %p132 = scmp.eq.s32.totalorder %s19, 3
      %p133 = por %p131, %p132
      %p134 = scmp.ne.s32.totalorder %s125, %s126
      %p135 = scmp.eq.s32.totalorder %s19, 0
      %p136 = por %p134, %p135
      %p137 = scmp.ne.s32.totalorder %s125, %s126
      %p138 = scmp.eq.s32.totalorder %s20, 3
      %p139 = por %p137, %p138
      %p141 = scmp.ne.s32.totalorder %s126, %s140
      %p142 = scmp.eq.s32.totalorder %s20, 0
      %p143 = por %p141, %p142
      %s144 = ssub.s32 %s21, %s33
      %s145 = ssub.s32 %s22, %s29
      %s146 = sor.u32 %s144, %s145
      %p147 = scmp.eq.s32.totalorder %s146, 0
      %s149 = sadd.s32 %s148, 1
      %s150 = scalar_select %p147, %s148, %s149
      %p153 = pneg %p147
      %p154 = scmp.eq.s32.totalorder %s14, 3
      %p155 = por %p153, %p154
      %p156 = scmp.ne.s32.totalorder %s148, %s151
      %p157 = scmp.eq.s32.totalorder %s14, 0
      %p158 = por %p156, %p157
      %p159 = scmp.ne.s32.totalorder %s148, %s151
      %p160 = scmp.eq.s32.totalorder %s19, 3
      %p161 = por %p159, %p160
      %p162 = scmp.ne.s32.totalorder %s151, %s152
      %p163 = scmp.eq.s32.totalorder %s19, 0
      %p164 = por %p162, %p163
      %p165 = scmp.ne.s32.totalorder %s151, %s152
      %p166 = scmp.eq.s32.totalorder %s20, 3
      %p167 = por %p165, %p166
      %p169 = scmp.ne.s32.totalorder %s152, %s168
      %p170 = scmp.eq.s32.totalorder %s20, 0
      %p171 = por %p169, %p170
      %p172 = scmp.le.s32.totalorder 1, %s14
      %p173 = scmp.lt.s32.totalorder %s14, 5
      %p174 = pnand %p172, %p173
      %p175 = pneg %p174
      // Predicated region
      $region9: #{tpu_custom_call.1} parent=5 // pred_check
        _
      $region10: #{tpu_custom_call.1} parent=5 // pred_check_branch
        %177 = sbr.rel (%p174) target = $region12
      $region11: #{tpu_custom_call.1} parent=5 // pred_region
        %s178 = ssub.s32 %s14, 1
        // Predicated region
        $region13: #{tpu_custom_call.1} parent=11 // pred_check
          %p179 = pneg %p73
        $region14: #{tpu_custom_call.1} parent=11 // pred_check_branch
          %181 = sbr.rel (%p179) target = $region16
        $region15: #{tpu_custom_call.1} parent=11 // pred_region
          _
        $region16: #{tpu_custom_call.1} parent=11 // pred_fallthru
          _
        // Predicated region
        $region17: #{tpu_custom_call.1} parent=11 // pred_check
          %p182 = pneg %p94
        $region18: #{tpu_custom_call.1} parent=11 // pred_check_branch
          %184 = sbr.rel (%p182) target = $region20
        $region19: #{tpu_custom_call.1} parent=11 // pred_region
          _
        $region20: #{tpu_custom_call.1} parent=11 // pred_fallthru
          _
        // Predicated region
        $region21: #{tpu_custom_call.1} parent=11 // pred_check
          %p185 = pneg %p115
        $region22: #{tpu_custom_call.1} parent=11 // pred_check_branch
          %187 = sbr.rel (%p185) target = $region24
        $region23: #{tpu_custom_call.1} parent=11 // pred_region
          _
        $region24: #{tpu_custom_call.1} parent=11 // pred_fallthru
          _
        // Predicated region
        $region25: #{tpu_custom_call.1} parent=11 // pred_check
          %p188 = pneg %p136
        $region26: #{tpu_custom_call.1} parent=11 // pred_check_branch
          %190 = sbr.rel (%p188) target = $region28
        $region27: #{tpu_custom_call.1} parent=11 // pred_region
          _
        $region28: #{tpu_custom_call.1} parent=11 // pred_fallthru
          _
      $region12: #{tpu_custom_call.1} parent=5 // pred_fallthru
        _
      %p191 = scmp.lt.s32.totalorder %s14, 4
      // Predicated region
      $region29: #{tpu_custom_call.1} parent=5 // pred_check
        %p192 = pneg %p191
      $region30: #{tpu_custom_call.1} parent=5 // pred_check_branch
        %194 = sbr.rel (%p192) target = $region32
      $region31: #{tpu_custom_call.1} parent=5 // pred_region
        // Predicated region
        $region33: #{tpu_custom_call.1} parent=31 // pred_check
          %p195 = pneg %p46
        $region34: #{tpu_custom_call.1} parent=31 // pred_check_branch
          %197 = sbr.rel (%p195) target = $region36
        $region35: #{tpu_custom_call.1} parent=31 // pred_region
          %p198 = scmp.lt.s32.totalorder %s21, 1
          %s199 = scalar_select %p198, %s21, 1
          %s200 = smul.addr %s199, 54
          %s201 = smul.addr %s200, 4
          %s202 = scalar_lea.vmem %s0, %s201
        $region36: #{tpu_custom_call.1} parent=31 // pred_fallthru
          _
      $region32: #{tpu_custom_call.1} parent=5 // pred_fallthru
        _
      %p203 = scmp.le.s32.totalorder 1, %s14
      %p204 = scmp.lt.s32.totalorder %s14, 5
      %p205 = pnand %p203, %p204
      %p206 = pneg %p205
      // Predicated region
      $region37: #{tpu_custom_call.1} parent=5 // pred_check
        _
      $region38: #{tpu_custom_call.1} parent=5 // pred_check_branch
        %208 = sbr.rel (%p205) target = $region40
      $region39: #{tpu_custom_call.1} parent=5 // pred_region
        %s209 = ssub.s32 %s14, 1
        %p210 = scmp.lt.s32.totalorder %s23, 1
        %s211 = scalar_select %p210, %s23, 1
        %s212 = smul.addr %s211, 54
        %s213 = smul.addr %s212, 4
        %s214 = scalar_lea.vmem %s0, %s213
        %p215 = pneg %p52
        %p216 = pneg %p49
        %p217 = pneg %p73
        %p218 = pneg %p70
        %p219 = pneg %p94
        %p220 = pneg %p91
        %p221 = pneg %p115
        %p222 = pneg %p112
        %p223 = pneg %p136
        %p224 = pneg %p133
        %p225 = pneg %p164
        %p226 = pneg %p161
        %s227 = sand.u32 %s151, 1
        %s228 = scalar_lea.sflag [#allocation3], %s227
        %s229 = sand.u32 %s151, 1
        %s230 = smul.addr %s229, 128
        %s231 = scalar_lea.vmem [#allocation2], %s230
        %p232 = scmp.lt.s32.totalorder %s23, 1
        %s233 = scalar_select %p232, %s23, 1
        %s234 = smul.addr %s233, 54
        %s235 = smul.addr %s234, 4
        %s236 = scalar_lea.vmem %s0, %s235
        %s237 = smul.u32 8, %s24
        %s239 = smul.u32 %s24, 8
        %s240 = smul.u32 %s239, 3
        %s241 = smul.addr %s240, 4
        %s242 = scalar_lea.vmem %s236, %s241
        %v243 = vld [vmem:[%s242] sm:$0xf]
        %v244 = vld [vmem:[%s242 + $0x4] sm:$0xf]
        %v245 = vld [vmem:[%s242 + $0xc] sm:$0xf]
        %v246 = vld [vmem:[%s242 + $0x10] sm:$0xf]
        %v247 = vld [vmem:[%s242 + $0x18] sm:$0xf]
        %v248 = vld [vmem:[%s242 + $0x1c] sm:$0xf]
        %v249 = vld [vmem:[%s242 + $0x24] sm:$0xf]
        %v250 = vld [vmem:[%s242 + $0x28] sm:$0xf]
        %v251 = vld [vmem:[%s242 + $0x30] sm:$0xf]
        %v252 = vld [vmem:[%s242 + $0x34] sm:$0xf]
        %v253 = vld [vmem:[%s242 + $0x3c] sm:$0xf]
        %v254 = vld [vmem:[%s242 + $0x40] sm:$0xf]
        %v255 = vld [vmem:[%s242 + $0x48] sm:$0xf]
        %v256 = vld [vmem:[%s242 + $0x4c] sm:$0xf]
        %v257 = vld [vmem:[%s242 + $0x54] sm:$0xf]
        %v258 = vld [vmem:[%s242 + $0x58] sm:$0xf]
        %v259 = vld [vmem:[%s1] sm:$0x3]
        %v260 = vld [vmem:[%s242 + $0x8] sm:$0x1]
        %v261 = vld [vmem:[%s242 + $0x14] sm:$0x1]
        %v262 = vld [vmem:[%s242 + $0x20] sm:$0x1]
        %v263 = vld [vmem:[%s242 + $0x2c] sm:$0x1]
        %v264 = vld [vmem:[%s242 + $0x38] sm:$0x1]
        %v265 = vld [vmem:[%s242 + $0x44] sm:$0x1]
        %v266 = vld [vmem:[%s242 + $0x50] sm:$0x1]
        %v267 = vld [vmem:[%s242 + $0x5c] sm:$0x1]
        %vm268 = vsmask.f32 3328
        %vm269 = vsmask.f32 7440
        %vm270 = vmor %vm268, %vm269
        %v272 = vshrl.u32 %v243, 16
        %v274 = vrot.slane %v272, 4
        %v275 = vshll.u32 %v243, 16
        %v277 = vrot.slane %v275, 5
        %v278 = vor.u32 %v274, %v277
        %v279 = vrot.slane %v278, 4
        %v281 = vshll.u32 %v244, 16
        %v283 = vrot.slane %v281, 5
        %v284 = vsel %vm270, %v279, %v283
        %v285 = vshrl.u32 %v244, 16
        %v287 = vrot.slane %v285, 4
        %v288 = vor.u32 %v287, %v283
        %v289 = vrot.slane %v288, 4
        %v291 = vshll.u32 %v260, 16
        %v293 = vrot.slane %v291, 5
        %v294 = vsel %vm270, %v289, %v293
        %v296 = vshrl.u32 %v245, 16
        %v298 = vrot.slane %v296, 4
        %v299 = vshll.u32 %v245, 16
        %v301 = vrot.slane %v299, 5
        %v302 = vor.u32 %v298, %v301
        %v303 = vrot.slane %v302, 4
        %v305 = vshll.u32 %v246, 16
        %v307 = vrot.slane %v305, 5
        %v308 = vsel %vm270, %v303, %v307
        %v309 = vshrl.u32 %v246, 16
        %v311 = vrot.slane %v309, 4
        %v312 = vor.u32 %v311, %v307
        %v313 = vrot.slane %v312, 4
        %v315 = vshll.u32 %v261, 16
        %v317 = vrot.slane %v315, 5
        %v318 = vsel %vm270, %v313, %v317
        %v320 = vshrl.u32 %v247, 16
        %v322 = vrot.slane %v320, 4
        %v323 = vshll.u32 %v247, 16
        %v325 = vrot.slane %v323, 5
        %v326 = vor.u32 %v322, %v325
        %v327 = vrot.slane %v326, 4
        %v329 = vshll.u32 %v248, 16
        %v331 = vrot.slane %v329, 5
        %v332 = vsel %vm270, %v327, %v331
        %v333 = vshrl.u32 %v248, 16
        %v335 = vrot.slane %v333, 4
        %v336 = vor.u32 %v335, %v331
        %v337 = vrot.slane %v336, 4
        %v339 = vshll.u32 %v262, 16
        %v341 = vrot.slane %v339, 5
        %v342 = vsel %vm270, %v337, %v341
        %v344 = vshrl.u32 %v249, 16
        %v346 = vrot.slane %v344, 4
        %v347 = vshll.u32 %v249, 16
        %v349 = vrot.slane %v347, 5
        %v350 = vor.u32 %v346, %v349
        %v351 = vrot.slane %v350, 4
        %v353 = vshll.u32 %v250, 16
        %v355 = vrot.slane %v353, 5
        %v356 = vsel %vm270, %v351, %v355
        %v357 = vshrl.u32 %v250, 16
        %v359 = vrot.slane %v357, 4
        %v360 = vor.u32 %v359, %v355
        %v361 = vrot.slane %v360, 4
        %v363 = vshll.u32 %v263, 16
        %v365 = vrot.slane %v363, 5
        %v366 = vsel %vm270, %v361, %v365
        %v368 = vshrl.u32 %v251, 16
        %v370 = vrot.slane %v368, 4
        %v371 = vshll.u32 %v251, 16
        %v373 = vrot.slane %v371, 5
        %v374 = vor.u32 %v370, %v373
        %v375 = vrot.slane %v374, 4
        %v377 = vshll.u32 %v252, 16
        %v379 = vrot.slane %v377, 5
        %v380 = vsel %vm270, %v375, %v379
        %v381 = vshrl.u32 %v252, 16
        %v383 = vrot.slane %v381, 4
        %v384 = vor.u32 %v383, %v379
        %v385 = vrot.slane %v384, 4
        %v387 = vshll.u32 %v264, 16
        %v389 = vrot.slane %v387, 5
        %v390 = vsel %vm270, %v385, %v389
        %v392 = vshrl.u32 %v253, 16
        %v394 = vrot.slane %v392, 4
        %v395 = vshll.u32 %v253, 16
        %v397 = vrot.slane %v395, 5
        %v398 = vor.u32 %v394, %v397
        %v399 = vrot.slane %v398, 4
        %v401 = vshll.u32 %v254, 16
        %v403 = vrot.slane %v401, 5
        %v404 = vsel %vm270, %v399, %v403
        %v405 = vshrl.u32 %v254, 16
        %v407 = vrot.slane %v405, 4
        %v408 = vor.u32 %v407, %v403
        %v409 = vrot.slane %v408, 4
        %v411 = vshll.u32 %v265, 16
        %v413 = vrot.slane %v411, 5
        %v414 = vsel %vm270, %v409, %v413
        %v416 = vshrl.u32 %v255, 16
        %v418 = vrot.slane %v416, 4
        %v419 = vshll.u32 %v255, 16
        %v421 = vrot.slane %v419, 5
        %v422 = vor.u32 %v418, %v421
        %v423 = vrot.slane %v422, 4
        %v425 = vshll.u32 %v256, 16
        %v427 = vrot.slane %v425, 5
        %v428 = vsel %vm270, %v423, %v427
        %v429 = vshrl.u32 %v256, 16
        %v431 = vrot.slane %v429, 4
        %v432 = vor.u32 %v431, %v427
        %v433 = vrot.slane %v432, 4
        %v435 = vshll.u32 %v266, 16
        %v437 = vrot.slane %v435, 5
        %v438 = vsel %vm270, %v433, %v437
        %v440 = vshrl.u32 %v257, 16
        %v442 = vrot.slane %v440, 4
        %v443 = vshll.u32 %v257, 16
        %v445 = vrot.slane %v443, 5
        %v446 = vor.u32 %v442, %v445
        %v447 = vrot.slane %v446, 4
        %v449 = vshll.u32 %v258, 16
        %v451 = vrot.slane %v449, 5
        %v452 = vsel %vm270, %v447, %v451
        %v453 = vshrl.u32 %v258, 16
        %v455 = vrot.slane %v453, 4
        %v456 = vor.u32 %v455, %v451
        %v457 = vrot.slane %v456, 4
        %v459 = vshll.u32 %v267, 16
        %v461 = vrot.slane %v459, 5
        %v462 = vsel %vm270, %v457, %v461
        %s463 = scalar_lea.vmem %s1, 2
        %v464 = vld [vmem:[%s463] sm:$0x3]
        %v465 = vunpack.c.l.b16 %v284
        %v466 = vunpack.c.l.b16 %v294
        %v467 = vunpack.c.l.b16 %v308
        %v468 = vunpack.c.l.b16 %v318
        %v469 = vunpack.c.l.b16 %v332
        %v470 = vunpack.c.l.b16 %v342
        %v471 = vunpack.c.l.b16 %v356
        %v472 = vunpack.c.l.b16 %v366
        %v473 = vunpack.c.l.b16 %v380
        %v474 = vunpack.c.l.b16 %v390
        %v475 = vunpack.c.l.b16 %v404
        %v476 = vunpack.c.l.b16 %v414
        %v477 = vunpack.c.l.b16 %v428
        %v478 = vunpack.c.l.b16 %v438
        %v479 = vunpack.c.l.b16 %v452
        %v480 = vunpack.c.l.b16 %v462
        %v481 = vpack.c.b16 %v466, %v465
        %v482 = vpack.c.b16 %v468, %v467
        %v483 = vpack.c.b16 %v470, %v469
        %v484 = vpack.c.b16 %v472, %v471
        %v485 = vpack.c.b16 %v474, %v473
        %v486 = vpack.c.b16 %v476, %v475
        %v487 = vpack.c.b16 %v478, %v477
        %v488 = vpack.c.b16 %v480, %v479
        %vm489 = vcmask 31744
        %v491 = vsel %vm489, %v481, 0
        %v494 = vsel %vm489, %v482, 0
        %v497 = vsel %vm489, %v483, 0
        %v500 = vsel %vm489, %v484, 0
        %v503 = vsel %vm489, %v485, 0
        %v506 = vsel %vm489, %v486, 0
        %v509 = vsel %vm489, %v487, 0
        %v512 = vsel %vm489, %v488, 0
        %vm514 = vcmask 1041408
        %v516 = vsel %vm514, %v464, 0
        %518 = vmatprep.subr.bf16.mxu0 0
        %519 = vmatpush1.bf16.msra.mxu0 %v516
        %520 = vmatprep.subr.bf16.mxu0 0
        %521 = vmatpush1.bf16.msra.mxu0 0
        %522 = vmatprep.subr.bf16.mxu0 0
        %523 = vmatpush1.bf16.msra.mxu0 0
        %524 = vmatprep.subr.bf16.mxu0 0
        %525 = vmatpush1.bf16.msra.mxu0 0
        %526 = vmatprep.subr.bf16.mxu0 0
        %527 = vmatpush1.bf16.msra.mxu0 0
        %528 = vmatprep.subr.bf16.mxu0 0
        %529 = vmatpush1.bf16.msra.mxu0 0
        %530 = vmatprep.subr.bf16.mxu0 0
        %531 = vmatpush1.bf16.msra.mxu0 0
        %532 = vmatprep.subr.bf16.mxu0 0
        %533 = vmatpush1.bf16.msra.mxu0 0
        %534 = vmatprep.subr.bf16.mxu0 0
        %535 = vmatpush1.bf16.msra.mxu0 0
        %536 = vmatprep.subr.bf16.mxu0 0
        %537 = vmatpush1.bf16.msra.mxu0 0
        %538 = vmatprep.subr.bf16.mxu0 0
        %539 = vmatpush1.bf16.msra.mxu0 0
        %540 = vmatprep.subr.bf16.mxu0 0
        %541 = vmatpush1.bf16.msra.mxu0 0
        %542 = vmatprep.subr.bf16.mxu0 0
        %543 = vmatpush1.bf16.msra.mxu0 0
        %544 = vmatprep.subr.bf16.mxu0 0
        %545 = vmatpush1.bf16.msra.mxu0 0
        %546 = vmatprep.subr.bf16.mxu0 0
        %547 = vmatpush1.bf16.msra.mxu0 0
        %548 = vmatprep.subr.bf16.mxu0 0
        %549 = vmatpush1.bf16.msra.mxu0 0
        %550 = vmatprep.mubr.bf16.mxu0 0
        %551 = vmatmul.mubr.bf16.gmra.mrb[0].mxu0 %v491
        %v552 = vpop.f32.mrb[0].mxu0
        %v553 = vadd.f32 0.0, %v552
        %v554 = vpop.f32.mrb[0].mxu0
        %v555 = vpop.f32.mrb[0].mxu0
        %v556 = vadd.f32 0.0, %v555
        %v557 = vpop.f32.mrb[0].mxu0
        %558 = vmatprep.mubr.bf16.mxu0 0
        %559 = vmatmul.mubr.bf16.gmra.mrb[0].mxu0 %v494
        %v560 = vpop.f32.mrb[0].mxu0
        %v561 = vadd.f32 0.0, %v560
        %v562 = vpop.f32.mrb[0].mxu0
        %v563 = vpop.f32.mrb[0].mxu0
        %v564 = vadd.f32 0.0, %v563
        %v565 = vpop.f32.mrb[0].mxu0
        %566 = vmatprep.mubr.bf16.mxu0 0
        %567 = vmatmul.mubr.bf16.gmra.mrb[0].mxu0 %v497
        %v568 = vpop.f32.mrb[0].mxu0
        %v569 = vadd.f32 0.0, %v568
        %v570 = vpop.f32.mrb[0].mxu0
        %v571 = vpop.f32.mrb[0].mxu0
        %v572 = vadd.f32 0.0, %v571
        %v573 = vpop.f32.mrb[0].mxu0
        %574 = vmatprep.mubr.bf16.mxu0 0
        %575 = vmatmul.mubr.bf16.gmra.mrb[0].mxu0 %v500
        %v576 = vpop.f32.mrb[0].mxu0
        %v577 = vadd.f32 0.0, %v576
        %v578 = vpop.f32.mrb[0].mxu0
        %v579 = vpop.f32.mrb[0].mxu0
        %v580 = vadd.f32 0.0, %v579
        %v581 = vpop.f32.mrb[0].mxu0
        %582 = vmatprep.mubr.bf16.mxu0 0
        %583 = vmatmul.mubr.bf16.gmra.mrb[0].mxu0 %v503
        %v584 = vpop.f32.mrb[0].mxu0
        %v585 = vadd.f32 0.0, %v584
        %v586 = vpop.f32.mrb[0].mxu0
        %v587 = vpop.f32.mrb[0].mxu0
        %v588 = vadd.f32 0.0, %v587
        %v589 = vpop.f32.mrb[0].mxu0
        %590 = vmatprep.mubr.bf16.mxu0 0
        %591 = vmatmul.mubr.bf16.gmra.mrb[0].mxu0 %v506
        %v592 = vpop.f32.mrb[0].mxu0
        %v593 = vadd.f32 0.0, %v592
        %v594 = vpop.f32.mrb[0].mxu0
        %v595 = vpop.f32.mrb[0].mxu0
        %v596 = vadd.f32 0.0, %v595
        %v597 = vpop.f32.mrb[0].mxu0
        %598 = vmatprep.mubr.bf16.mxu0 0
        %599 = vmatmul.mubr.bf16.gmra.mrb[0].mxu0 %v509
        %v600 = vpop.f32.mrb[0].mxu0
        %v601 = vadd.f32 0.0, %v600
        %v602 = vpop.f32.mrb[0].mxu0
        %v603 = vpop.f32.mrb[0].mxu0
        %v604 = vadd.f32 0.0, %v603
        %v605 = vpop.f32.mrb[0].mxu0
        %606 = vmatprep.mubr.bf16.mxu0 0
        %607 = vmatmul.mubr.bf16.gmra.mrb[0].mxu0 %v512
        %v608 = vpop.f32.mrb[0].mxu0
        %v609 = vadd.f32 0.0, %v608
        %v610 = vpop.f32.mrb[0].mxu0
        %v611 = vpop.f32.mrb[0].mxu0
        %v612 = vadd.f32 0.0, %v611
        %v613 = vpop.f32.mrb[0].mxu0
        %614 = vdwg.mxu0
        %v631 = vunpack.c.l.b16 %v243
        %v632 = vunpack.c.l.b16 %v244
        %v633 = vunpack.c.l.b16 %v245
        %v634 = vunpack.c.l.b16 %v246
        %v635 = vunpack.c.l.b16 %v247
        %v636 = vunpack.c.l.b16 %v248
        %v637 = vunpack.c.l.b16 %v249
        %v638 = vunpack.c.l.b16 %v250
        %v639 = vunpack.c.l.b16 %v251
        %v640 = vunpack.c.l.b16 %v252
        %v641 = vunpack.c.l.b16 %v253
        %v642 = vunpack.c.l.b16 %v254
        %v643 = vunpack.c.l.b16 %v255
        %v644 = vunpack.c.l.b16 %v256
        %v645 = vunpack.c.l.b16 %v257
        %v646 = vunpack.c.l.b16 %v258
        %v647 = vpack.c.b16 %v632, %v631
        %v648 = vpack.c.b16 %v634, %v633
        %v649 = vpack.c.b16 %v636, %v635
        %v650 = vpack.c.b16 %v638, %v637
        %v651 = vpack.c.b16 %v640, %v639
        %v652 = vpack.c.b16 %v642, %v641
        %v653 = vpack.c.b16 %v644, %v643
        %v654 = vpack.c.b16 %v646, %v645
        %v656 = vsel %vm489, %v647, 0
        %v659 = vsel %vm489, %v648, 0
        %v662 = vsel %vm489, %v649, 0
        %v665 = vsel %vm489, %v650, 0
        %v668 = vsel %vm489, %v651, 0
        %v671 = vsel %vm489, %v652, 0
        %v674 = vsel %vm489, %v653, 0
        %v677 = vsel %vm489, %v654, 0
        %v680 = vsel %vm514, %v259, 0
        %682 = vmatprep.subr.bf16.mxu0 0
        %683 = vmatpush1.bf16.msra.mxu0 %v680
        %684 = vmatprep.subr.bf16.mxu0 0
        %685 = vmatpush1.bf16.msra.mxu0 0
        %686 = vmatprep.subr.bf16.mxu0 0
        %687 = vmatpush1.bf16.msra.mxu0 0
        %688 = vmatprep.subr.bf16.mxu0 0
        %689 = vmatpush1.bf16.msra.mxu0 0
        %690 = vmatprep.subr.bf16.mxu0 0
        %691 = vmatpush1.bf16.msra.mxu0 0
        %692 = vmatprep.subr.bf16.mxu0 0
        %693 = vmatpush1.bf16.msra.mxu0 0
        %694 = vmatprep.subr.bf16.mxu0 0
        %695 = vmatpush1.bf16.msra.mxu0 0
        %696 = vmatprep.subr.bf16.mxu0 0
        %697 = vmatpush1.bf16.msra.mxu0 0
        %698 = vmatprep.subr.bf16.mxu0 0
        %699 = vmatpush1.bf16.msra.mxu0 0
        %700 = vmatprep.subr.bf16.mxu0 0
        %701 = vmatpush1.bf16.msra.mxu0 0
        %702 = vmatprep.subr.bf16.mxu0 0
        %703 = vmatpush1.bf16.msra.mxu0 0
        %704 = vmatprep.subr.bf16.mxu0 0
        %705 = vmatpush1.bf16.msra.mxu0 0
        %706 = vmatprep.subr.bf16.mxu0 0
        %707 = vmatpush1.bf16.msra.mxu0 0
        %708 = vmatprep.subr.bf16.mxu0 0
        %709 = vmatpush1.bf16.msra.mxu0 0
        %710 = vmatprep.subr.bf16.mxu0 0
        %711 = vmatpush1.bf16.msra.mxu0 0
        %712 = vmatprep.subr.bf16.mxu0 0
        %713 = vmatpush1.bf16.msra.mxu0 0
        %714 = vmatprep.mubr.bf16.mxu0 0
        %715 = vmatmul.mubr.bf16.gmra.mrb[0].mxu0 %v656
        %v716 = vpop.f32.mrb[0].mxu0
        %v717 = vadd.f32 %v553, %v716
        %v718 = vpop.f32.mrb[0].mxu0
        %v719 = vpop.f32.mrb[0].mxu0
        %v720 = vadd.f32 %v556, %v719
        %v721 = vpop.f32.mrb[0].mxu0
        %722 = vmatprep.mubr.bf16.mxu0 0
        %723 = vmatmul.mubr.bf16.gmra.mrb[0].mxu0 %v659
        %v724 = vpop.f32.mrb[0].mxu0
        %v725 = vadd.f32 %v561, %v724
        %v726 = vpop.f32.mrb[0].mxu0
        %v727 = vpop.f32.mrb[0].mxu0
        %v728 = vadd.f32 %v564, %v727
        %v729 = vpop.f32.mrb[0].mxu0
        %730 = vmatprep.mubr.bf16.mxu0 0
        %731 = vmatmul.mubr.bf16.gmra.mrb[0].mxu0 %v662
        %v732 = vpop.f32.mrb[0].mxu0
        %v733 = vadd.f32 %v569, %v732
        %v734 = vpop.f32.mrb[0].mxu0
        %v735 = vpop.f32.mrb[0].mxu0
        %v736 = vadd.f32 %v572, %v735
        %v737 = vpop.f32.mrb[0].mxu0
        %738 = vmatprep.mubr.bf16.mxu0 0
        %739 = vmatmul.mubr.bf16.gmra.mrb[0].mxu0 %v665
        %v740 = vpop.f32.mrb[0].mxu0
        %v741 = vadd.f32 %v577, %v740
        %v742 = vpop.f32.mrb[0].mxu0
        %v743 = vpop.f32.mrb[0].mxu0
        %v744 = vadd.f32 %v580, %v743
        %v745 = vpop.f32.mrb[0].mxu0
        %746 = vmatprep.mubr.bf16.mxu0 0
        %747 = vmatmul.mubr.bf16.gmra.mrb[0].mxu0 %v668
        %v748 = vpop.f32.mrb[0].mxu0
        %v749 = vadd.f32 %v585, %v748
        %v750 = vpop.f32.mrb[0].mxu0
        %v751 = vpop.f32.mrb[0].mxu0
        %v752 = vadd.f32 %v588, %v751
        %v753 = vpop.f32.mrb[0].mxu0
        %754 = vmatprep.mubr.bf16.mxu0 0
        %755 = vmatmul.mubr.bf16.gmra.mrb[0].mxu0 %v671
        %v756 = vpop.f32.mrb[0].mxu0
        %v757 = vadd.f32 %v593, %v756
        %v758 = vpop.f32.mrb[0].mxu0
        %v759 = vpop.f32.mrb[0].mxu0
        %v760 = vadd.f32 %v596, %v759
        %v761 = vpop.f32.mrb[0].mxu0
        %762 = vmatprep.mubr.bf16.mxu0 0
        %763 = vmatmul.mubr.bf16.gmra.mrb[0].mxu0 %v674
        %v764 = vpop.f32.mrb[0].mxu0
        %v765 = vadd.f32 %v601, %v764
        %v766 = vpop.f32.mrb[0].mxu0
        %v767 = vpop.f32.mrb[0].mxu0
        %v768 = vadd.f32 %v604, %v767
        %v769 = vpop.f32.mrb[0].mxu0
        %770 = vmatprep.mubr.bf16.mxu0 0
        %771 = vmatmul.mubr.bf16.gmra.mrb[0].mxu0 %v677
        %v772 = vpop.f32.mrb[0].mxu0
        %v773 = vadd.f32 %v609, %v772
        %v774 = vpop.f32.mrb[0].mxu0
        %v775 = vpop.f32.mrb[0].mxu0
        %v776 = vadd.f32 %v612, %v775
        %v777 = vpop.f32.mrb[0].mxu0
        %778 = vdwg.mxu0
        %v779 = vld [vmem:[%s242] sm:$0xe]
        %v780 = vld [vmem:[%s242 + $0xc] sm:$0xe]
        %v781 = vld [vmem:[%s242 + $0x18] sm:$0xe]
        %v782 = vld [vmem:[%s242 + $0x24] sm:$0xe]
        %v783 = vld [vmem:[%s242 + $0x30] sm:$0xe]
        %v784 = vld [vmem:[%s242 + $0x3c] sm:$0xe]
        %v785 = vld [vmem:[%s242 + $0x48] sm:$0xe]
        %v786 = vld [vmem:[%s242 + $0x54] sm:$0xe]
        %vm803 = vcmask 1042432
        %vm804 = vcmask 1046532
        %vm805 = vmor %vm803, %vm804
        %v806 = vrot.slane %v779, 5
        %v807 = vrot.slane %v806, 4
        %v808 = vrot.slane %v244, 5
        %v809 = vsel %vm805, %v807, %v808
        %v810 = vrot.slane %v808, 4
        %v811 = vrot.slane %v260, 5
        %v812 = vsel %vm805, %v810, %v811
        %v813 = vrot.slane %v780, 5
        %v814 = vrot.slane %v813, 4
        %v815 = vrot.slane %v246, 5
        %v816 = vsel %vm805, %v814, %v815
        %v817 = vrot.slane %v815, 4
        %v818 = vrot.slane %v261, 5
        %v819 = vsel %vm805, %v817, %v818
        %v820 = vrot.slane %v781, 5
        %v821 = vrot.slane %v820, 4
        %v822 = vrot.slane %v248, 5
        %v823 = vsel %vm805, %v821, %v822
        %v824 = vrot.slane %v822, 4
        %v825 = vrot.slane %v262, 5
        %v826 = vsel %vm805, %v824, %v825
        %v827 = vrot.slane %v782, 5
        %v828 = vrot.slane %v827, 4
        %v829 = vrot.slane %v250, 5
        %v830 = vsel %vm805, %v828, %v829
        %v831 = vrot.slane %v829, 4
        %v832 = vrot.slane %v263, 5
        %v833 = vsel %vm805, %v831, %v832
        %v834 = vrot.slane %v783, 5
        %v835 = vrot.slane %v834, 4
        %v836 = vrot.slane %v252, 5
        %v837 = vsel %vm805, %v835, %v836
        %v838 = vrot.slane %v836, 4
        %v839 = vrot.slane %v264, 5
        %v840 = vsel %vm805, %v838, %v839
        %v841 = vrot.slane %v784, 5
        %v842 = vrot.slane %v841, 4
        %v843 = vrot.slane %v254, 5
        %v844 = vsel %vm805, %v842, %v843
        %v845 = vrot.slane %v843, 4
        %v846 = vrot.slane %v265, 5
        %v847 = vsel %vm805, %v845, %v846
        %v848 = vrot.slane %v785, 5
        %v849 = vrot.slane %v848, 4
        %v850 = vrot.slane %v256, 5
        %v851 = vsel %vm805, %v849, %v850
        %v852 = vrot.slane %v850, 4
        %v853 = vrot.slane %v266, 5
        %v854 = vsel %vm805, %v852, %v853
        %v855 = vrot.slane %v786, 5
        %v856 = vrot.slane %v855, 4
        %v857 = vrot.slane %v258, 5
        %v858 = vsel %vm805, %v856, %v857
        %v859 = vrot.slane %v857, 4
        %v860 = vrot.slane %v267, 5
        %v861 = vsel %vm805, %v859, %v860
        %s862 = scalar_lea.vmem %s1, 4
        %v863 = vld [vmem:[%s862] sm:$0x3]
        %v864 = vunpack.c.l.b16 %v809
        %v865 = vunpack.c.l.b16 %v812
        %v866 = vunpack.c.l.b16 %v816
        %v867 = vunpack.c.l.b16 %v819
        %v868 = vunpack.c.l.b16 %v823
        %v869 = vunpack.c.l.b16 %v826
        %v870 = vunpack.c.l.b16 %v830
        %v871 = vunpack.c.l.b16 %v833
        %v872 = vunpack.c.l.b16 %v837
        %v873 = vunpack.c.l.b16 %v840
        %v874 = vunpack.c.l.b16 %v844
        %v875 = vunpack.c.l.b16 %v847
        %v876 = vunpack.c.l.b16 %v851
        %v877 = vunpack.c.l.b16 %v854
        %v878 = vunpack.c.l.b16 %v858
        %v879 = vunpack.c.l.b16 %v861
        %v880 = vpack.c.b16 %v865, %v864
        %v881 = vpack.c.b16 %v867, %v866
        %v882 = vpack.c.b16 %v869, %v868
        %v883 = vpack.c.b16 %v871, %v870
        %v884 = vpack.c.b16 %v873, %v872
        %v885 = vpack.c.b16 %v875, %v874
        %v886 = vpack.c.b16 %v877, %v876
        %v887 = vpack.c.b16 %v879, %v878
        %v889 = vsel %vm489, %v880, 0
        %v892 = vsel %vm489, %v881, 0
        %v895 = vsel %vm489, %v882, 0
        %v898 = vsel %vm489, %v883, 0
        %v901 = vsel %vm489, %v884, 0
        %v904 = vsel %vm489, %v885, 0
        %v907 = vsel %vm489, %v886, 0
        %v910 = vsel %vm489, %v887, 0
        %v913 = vsel %vm514, %v863, 0
        %915 = vmatprep.subr.bf16.mxu0 0
        %916 = vmatpush1.bf16.msra.mxu0 %v913
        %917 = vmatprep.subr.bf16.mxu0 0
        %918 = vmatpush1.bf16.msra.mxu0 0
        %919 = vmatprep.subr.bf16.mxu0 0
        %920 = vmatpush1.bf16.msra.mxu0 0
        %921 = vmatprep.subr.bf16.mxu0 0
        %922 = vmatpush1.bf16.msra.mxu0 0
        %923 = vmatprep.subr.bf16.mxu0 0
        %924 = vmatpush1.bf16.msra.mxu0 0
        %925 = vmatprep.subr.bf16.mxu0 0
        %926 = vmatpush1.bf16.msra.mxu0 0
        %927 = vmatprep.subr.bf16.mxu0 0
        %928 = vmatpush1.bf16.msra.mxu0 0
        %929 = vmatprep.subr.bf16.mxu0 0
        %930 = vmatpush1.bf16.msra.mxu0 0
        %931 = vmatprep.subr.bf16.mxu0 0
        %932 = vmatpush1.bf16.msra.mxu0 0
        %933 = vmatprep.subr.bf16.mxu0 0
        %934 = vmatpush1.bf16.msra.mxu0 0
        %935 = vmatprep.subr.bf16.mxu0 0
        %936 = vmatpush1.bf16.msra.mxu0 0
        %937 = vmatprep.subr.bf16.mxu0 0
        %938 = vmatpush1.bf16.msra.mxu0 0
        %939 = vmatprep.subr.bf16.mxu0 0
        %940 = vmatpush1.bf16.msra.mxu0 0
        %941 = vmatprep.subr.bf16.mxu0 0
        %942 = vmatpush1.bf16.msra.mxu0 0
        %943 = vmatprep.subr.bf16.mxu0 0
        %944 = vmatpush1.bf16.msra.mxu0 0
        %945 = vmatprep.subr.bf16.mxu0 0
        %946 = vmatpush1.bf16.msra.mxu0 0
        %947 = vmatprep.mubr.bf16.mxu0 0
        %948 = vmatmul.mubr.bf16.gmra.mrb[0].mxu0 %v889
        %v949 = vpop.f32.mrb[0].mxu0
        %v950 = vadd.f32 0.0, %v949
        %v951 = vpop.f32.mrb[0].mxu0
        %v952 = vpop.f32.mrb[0].mxu0
        %v953 = vadd.f32 0.0, %v952
        %v954 = vpop.f32.mrb[0].mxu0
        %955 = vmatprep.mubr.bf16.mxu0 0
        %956 = vmatmul.mubr.bf16.gmra.mrb[0].mxu0 %v892
        %v957 = vpop.f32.mrb[0].mxu0
        %v958 = vadd.f32 0.0, %v957
        %v959 = vpop.f32.mrb[0].mxu0
        %v960 = vpop.f32.mrb[0].mxu0
        %v961 = vadd.f32 0.0, %v960
        %v962 = vpop.f32.mrb[0].mxu0
        %963 = vmatprep.mubr.bf16.mxu0 0
        %964 = vmatmul.mubr.bf16.gmra.mrb[0].mxu0 %v895
        %v965 = vpop.f32.mrb[0].mxu0
        %v966 = vadd.f32 0.0, %v965
        %v967 = vpop.f32.mrb[0].mxu0
        %v968 = vpop.f32.mrb[0].mxu0
        %v969 = vadd.f32 0.0, %v968
        %v970 = vpop.f32.mrb[0].mxu0
        %971 = vmatprep.mubr.bf16.mxu0 0
        %972 = vmatmul.mubr.bf16.gmra.mrb[0].mxu0 %v898
        %v973 = vpop.f32.mrb[0].mxu0
        %v974 = vadd.f32 0.0, %v973
        %v975 = vpop.f32.mrb[0].mxu0
        %v976 = vpop.f32.mrb[0].mxu0
        %v977 = vadd.f32 0.0, %v976
        %v978 = vpop.f32.mrb[0].mxu0
        %979 = vmatprep.mubr.bf16.mxu0 0
        %980 = vmatmul.mubr.bf16.gmra.mrb[0].mxu0 %v901
        %v981 = vpop.f32.mrb[0].mxu0
        %v982 = vadd.f32 0.0, %v981
        %v983 = vpop.f32.mrb[0].mxu0
        %v984 = vpop.f32.mrb[0].mxu0
        %v985 = vadd.f32 0.0, %v984
        %v986 = vpop.f32.mrb[0].mxu0
        %987 = vmatprep.mubr.bf16.mxu0 0
        %988 = vmatmul.mubr.bf16.gmra.mrb[0].mxu0 %v904
        %v989 = vpop.f32.mrb[0].mxu0
        %v990 = vadd.f32 0.0, %v989
        %v991 = vpop.f32.mrb[0].mxu0
        %v992 = vpop.f32.mrb[0].mxu0
        %v993 = vadd.f32 0.0, %v992
        %v994 = vpop.f32.mrb[0].mxu0
        %995 = vmatprep.mubr.bf16.mxu0 0
        %996 = vmatmul.mubr.bf16.gmra.mrb[0].mxu0 %v907
        %v997 = vpop.f32.mrb[0].mxu0
        %v998 = vadd.f32 0.0, %v997
        %v999 = vpop.f32.mrb[0].mxu0
        %v1000 = vpop.f32.mrb[0].mxu0
        %v1001 = vadd.f32 0.0, %v1000
        %v1002 = vpop.f32.mrb[0].mxu0
        %1003 = vmatprep.mubr.bf16.mxu0 0
        %1004 = vmatmul.mubr.bf16.gmra.mrb[0].mxu0 %v910
        %v1005 = vpop.f32.mrb[0].mxu0
        %v1006 = vadd.f32 0.0, %v1005
        %v1007 = vpop.f32.mrb[0].mxu0
        %v1008 = vpop.f32.mrb[0].mxu0
        %v1009 = vadd.f32 0.0, %v1008
        %v1010 = vpop.f32.mrb[0].mxu0
        %1011 = vdwg.mxu0
        %v1012 = vadd.f32 %v717, %v950
        %v1013 = vadd.f32 %v720, %v953
        %v1014 = vadd.f32 %v725, %v958
        %v1015 = vadd.f32 %v728, %v961
        %v1016 = vadd.f32 %v733, %v966
        %v1017 = vadd.f32 %v736, %v969
        %v1018 = vadd.f32 %v741, %v974
        %v1019 = vadd.f32 %v744, %v977
        %v1020 = vadd.f32 %v749, %v982
        %v1021 = vadd.f32 %v752, %v985
        %v1022 = vadd.f32 %v757, %v990
        %v1023 = vadd.f32 %v760, %v993
        %v1024 = vadd.f32 %v765, %v998
        %v1025 = vadd.f32 %v768, %v1001
        %v1026 = vadd.f32 %v773, %v1006
        %v1027 = vadd.f32 %v776, %v1009
        %s1028 = sadd.s32 %s239, 1
        %s1029 = smul.u32 %s1028, 3
        %s1030 = smul.addr %s1029, 4
        %s1031 = scalar_lea.vmem %s236, %s1030
        %v1032 = vld [vmem:[%s1031] sm:$0xf]
        %v1033 = vld [vmem:[%s1031 + $0x4] sm:$0xf]
        %v1034 = vld [vmem:[%s1031 + $0xc] sm:$0xf]
        %v1035 = vld [vmem:[%s1031 + $0x10] sm:$0xf]
        %v1036 = vld [vmem:[%s1031 + $0x18] sm:$0xf]
        %v1037 = vld [vmem:[%s1031 + $0x1c] sm:$0xf]
        %v1038 = vld [vmem:[%s1031 + $0x24] sm:$0xf]
        %v1039 = vld [vmem:[%s1031 + $0x28] sm:$0xf]
        %v1040 = vld [vmem:[%s1031 + $0x30] sm:$0xf]
        %v1041 = vld [vmem:[%s1031 + $0x34] sm:$0xf]
        %v1042 = vld [vmem:[%s1031 + $0x3c] sm:$0xf]
        %v1043 = vld [vmem:[%s1031 + $0x40] sm:$0xf]
        %v1044 = vld [vmem:[%s1031 + $0x48] sm:$0xf]
        %v1045 = vld [vmem:[%s1031 + $0x4c] sm:$0xf]
        %v1046 = vld [vmem:[%s1031 + $0x54] sm:$0xf]
        %v1047 = vld [vmem:[%s1031 + $0x58] sm:$0xf]
        %s1048 = scalar_lea.vmem %s1, 6
        %v1049 = vld [vmem:[%s1048] sm:$0x3]
        %v1066 = vunpack.c.l.b16 %v1032
        %v1067 = vunpack.c.l.b16 %v1033
        %v1068 = vunpack.c.l.b16 %v1034
        %v1069 = vunpack.c.l.b16 %v1035
        %v1070 = vunpack.c.l.b16 %v1036
        %v1071 = vunpack.c.l.b16 %v1037
        %v1072 = vunpack.c.l.b16 %v1038
        %v1073 = vunpack.c.l.b16 %v1039
        %v1074 = vunpack.c.l.b16 %v1040
        %v1075 = vunpack.c.l.b16 %v1041
        %v1076 = vunpack.c.l.b16 %v1042
        %v1077 = vunpack.c.l.b16 %v1043
        %v1078 = vunpack.c.l.b16 %v1044
        %v1079 = vunpack.c.l.b16 %v1045
        %v1080 = vunpack.c.l.b16 %v1046
        %v1081 = vunpack.c.l.b16 %v1047
        %v1082 = vpack.c.b16 %v1067, %v1066
        %v1083 = vpack.c.b16 %v1069, %v1068
        %v1084 = vpack.c.b16 %v1071, %v1070
        %v1085 = vpack.c.b16 %v1073, %v1072
        %v1086 = vpack.c.b16 %v1075, %v1074
        %v1087 = vpack.c.b16 %v1077, %v1076
        %v1088 = vpack.c.b16 %v1079, %v1078
        %v1089 = vpack.c.b16 %v1081, %v1080
        %v1091 = vsel %vm489, %v1082, 0
        %v1094 = vsel %vm489, %v1083, 0
        %v1097 = vsel %vm489, %v1084, 0
        %v1100 = vsel %vm489, %v1085, 0
        %v1103 = vsel %vm489, %v1086, 0
        %v1106 = vsel %vm489, %v1087, 0
        %v1109 = vsel %vm489, %v1088, 0
        %v1112 = vsel %vm489, %v1089, 0
        %v1115 = vsel %vm514, %v1049, 0
        %1117 = vmatprep.subr.bf16.mxu0 0
        %1118 = vmatpush1.bf16.msra.mxu0 %v1115
        %1119 = vmatprep.subr.bf16.mxu0 0
        %1120 = vmatpush1.bf16.msra.mxu0 0
        %1121 = vmatprep.subr.bf16.mxu0 0
        %1122 = vmatpush1.bf16.msra.mxu0 0
        %1123 = vmatprep.subr.bf16.mxu0 0
        %1124 = vmatpush1.bf16.msra.mxu0 0
        %1125 = vmatprep.subr.bf16.mxu0 0
        %1126 = vmatpush1.bf16.msra.mxu0 0
        %1127 = vmatprep.subr.bf16.mxu0 0
        %1128 = vmatpush1.bf16.msra.mxu0 0
        %1129 = vmatprep.subr.bf16.mxu0 0
        %1130 = vmatpush1.bf16.msra.mxu0 0
        %1131 = vmatprep.subr.bf16.mxu0 0
        %1132 = vmatpush1.bf16.msra.mxu0 0
        %1133 = vmatprep.subr.bf16.mxu0 0
        %1134 = vmatpush1.bf16.msra.mxu0 0
        %1135 = vmatprep.subr.bf16.mxu0 0
        %1136 = vmatpush1.bf16.msra.mxu0 0
        %1137 = vmatprep.subr.bf16.mxu0 0
        %1138 = vmatpush1.bf16.msra.mxu0 0
        %1139 = vmatprep.subr.bf16.mxu0 0
        %1140 = vmatpush1.bf16.msra.mxu0 0
        %1141 = vmatprep.subr.bf16.mxu0 0
        %1142 = vmatpush1.bf16.msra.mxu0 0
        %1143 = vmatprep.subr.bf16.mxu0 0
        %1144 = vmatpush1.bf16.msra.mxu0 0
        %1145 = vmatprep.subr.bf16.mxu0 0
        %1146 = vmatpush1.bf16.msra.mxu0 0
        %1147 = vmatprep.subr.bf16.mxu0 0
        %1148 = vmatpush1.bf16.msra.mxu0 0
        %1149 = vmatprep.mubr.bf16.mxu0 0
        %1150 = vmatmul.mubr.bf16.gmra.mrb[0].mxu0 %v1091
        %v1151 = vpop.f32.mrb[0].mxu0
        %v1152 = vadd.f32 0.0, %v1151
        %v1153 = vpop.f32.mrb[0].mxu0
        %v1154 = vpop.f32.mrb[0].mxu0
        %v1155 = vadd.f32 0.0, %v1154
        %v1156 = vpop.f32.mrb[0].mxu0
        %1157 = vmatprep.mubr.bf16.mxu0 0
        %1158 = vmatmul.mubr.bf16.gmra.mrb[0].mxu0 %v1094
        %v1159 = vpop.f32.mrb[0].mxu0
        %v1160 = vadd.f32 0.0, %v1159
        %v1161 = vpop.f32.mrb[0].mxu0
        %v1162 = vpop.f32.mrb[0].mxu0
        %v1163 = vadd.f32 0.0, %v1162
        %v1164 = vpop.f32.mrb[0].mxu0
        %1165 = vmatprep.mubr.bf16.mxu0 0
        %1166 = vmatmul.mubr.bf16.gmra.mrb[0].mxu0 %v1097
        %v1167 = vpop.f32.mrb[0].mxu0
        %v1168 = vadd.f32 0.0, %v1167
        %v1169 = vpop.f32.mrb[0].mxu0
        %v1170 = vpop.f32.mrb[0].mxu0
        %v1171 = vadd.f32 0.0, %v1170
        %v1172 = vpop.f32.mrb[0].mxu0
        %1173 = vmatprep.mubr.bf16.mxu0 0
        %1174 = vmatmul.mubr.bf16.gmra.mrb[0].mxu0 %v1100
        %v1175 = vpop.f32.mrb[0].mxu0
        %v1176 = vadd.f32 0.0, %v1175
        %v1177 = vpop.f32.mrb[0].mxu0
        %v1178 = vpop.f32.mrb[0].mxu0
        %v1179 = vadd.f32 0.0, %v1178
        %v1180 = vpop.f32.mrb[0].mxu0
        %1181 = vmatprep.mubr.bf16.mxu0 0
        %1182 = vmatmul.mubr.bf16.gmra.mrb[0].mxu0 %v1103
        %v1183 = vpop.f32.mrb[0].mxu0
        %v1184 = vadd.f32 0.0, %v1183
        %v1185 = vpop.f32.mrb[0].mxu0
        %v1186 = vpop.f32.mrb[0].mxu0
        %v1187 = vadd.f32 0.0, %v1186
        %v1188 = vpop.f32.mrb[0].mxu0
        %1189 = vmatprep.mubr.bf16.mxu0 0
        %1190 = vmatmul.mubr.bf16.gmra.mrb[0].mxu0 %v1106
        %v1191 = vpop.f32.mrb[0].mxu0
        %v1192 = vadd.f32 0.0, %v1191
        %v1193 = vpop.f32.mrb[0].mxu0
        %v1194 = vpop.f32.mrb[0].mxu0
        %v1195 = vadd.f32 0.0, %v1194
        %v1196 = vpop.f32.mrb[0].mxu0
        %1197 = vmatprep.mubr.bf16.mxu0 0
        %1198 = vmatmul.mubr.bf16.gmra.mrb[0].mxu0 %v1109
        %v1199 = vpop.f32.mrb[0].mxu0
        %v1200 = vadd.f32 0.0, %v1199
        %v1201 = vpop.f32.mrb[0].mxu0
        %v1202 = vpop.f32.mrb[0].mxu0
        %v1203 = vadd.f32 0.0, %v1202
        %v1204 = vpop.f32.mrb[0].mxu0
        %1205 = vmatprep.mubr.bf16.mxu0 0
        %1206 = vmatmul.mubr.bf16.gmra.mrb[0].mxu0 %v1112
        %v1207 = vpop.f32.mrb[0].mxu0
        %v1208 = vadd.f32 0.0, %v1207
        %v1209 = vpop.f32.mrb[0].mxu0
        %v1210 = vpop.f32.mrb[0].mxu0
        %v1211 = vadd.f32 0.0, %v1210
        %v1212 = vpop.f32.mrb[0].mxu0
        %1213 = vdwg.mxu0
        %v1214 = vadd.f32 %v1012, %v1152
        %v1215 = vadd.f32 %v1013, %v1155
        %v1216 = vadd.f32 %v1014, %v1160
        %v1217 = vadd.f32 %v1015, %v1163
        %v1218 = vadd.f32 %v1016, %v1168
        %v1219 = vadd.f32 %v1017, %v1171
        %v1220 = vadd.f32 %v1018, %v1176
        %v1221 = vadd.f32 %v1019, %v1179
        %v1222 = vadd.f32 %v1020, %v1184
        %v1223 = vadd.f32 %v1021, %v1187
        %v1224 = vadd.f32 %v1022, %v1192
        %v1225 = vadd.f32 %v1023, %v1195
        %v1226 = vadd.f32 %v1024, %v1200
        %v1227 = vadd.f32 %v1025, %v1203
        %v1228 = vadd.f32 %v1026, %v1208
        %v1229 = vadd.f32 %v1027, %v1211
        %v1230 = vld [vmem:[%s1031] sm:$0xf]
        %v1231 = vld [vmem:[%s1031 + $0x4] sm:$0xf]
        %v1232 = vld [vmem:[%s1031 + $0x8] sm:$0x1]
        %v1233 = vld [vmem:[%s1031 + $0xc] sm:$0xf]
        %v1234 = vld [vmem:[%s1031 + $0x10] sm:$0xf]
        %v1235 = vld [vmem:[%s1031 + $0x14] sm:$0x1]
        %v1236 = vld [vmem:[%s1031 + $0x18] sm:$0xf]
        %v1237 = vld [vmem:[%s1031 + $0x1c] sm:$0xf]
        %v1238 = vld [vmem:[%s1031 + $0x20] sm:$0x1]
        %v1239 = vld [vmem:[%s1031 + $0x24] sm:$0xf]
        %v1240 = vld [vmem:[%s1031 + $0x28] sm:$0xf]
        %v1241 = vld [vmem:[%s1031 + $0x2c] sm:$0x1]
        %v1242 = vld [vmem:[%s1031 + $0x30] sm:$0xf]
        %v1243 = vld [vmem:[%s1031 + $0x34] sm:$0xf]
        %v1244 = vld [vmem:[%s1031 + $0x38] sm:$0x1]
        %v1245 = vld [vmem:[%s1031 + $0x3c] sm:$0xf]
        %v1246 = vld [vmem:[%s1031 + $0x40] sm:$0xf]
        %v1247 = vld [vmem:[%s1031 + $0x44] sm:$0x1]
        %v1248 = vld [vmem:[%s1031 + $0x48] sm:$0xf]
        %v1249 = vld [vmem:[%s1031 + $0x4c] sm:$0xf]
        %v1250 = vld [vmem:[%s1031 + $0x50] sm:$0x1]
        %v1251 = vld [vmem:[%s1031 + $0x54] sm:$0xf]
        %v1252 = vld [vmem:[%s1031 + $0x58] sm:$0xf]
        %v1253 = vld [vmem:[%s1031 + $0x5c] sm:$0x1]
        %v1255 = vshrl.u32 %v1230, 16
        %v1257 = vrot.slane %v1255, 4
        %v1258 = vshll.u32 %v1230, 16
        %v1260 = vrot.slane %v1258, 5
        %v1261 = vor.u32 %v1257, %v1260
        %v1262 = vrot.slane %v1261, 4
        %v1264 = vshll.u32 %v1231, 16
        %v1266 = vrot.slane %v1264, 5
        %v1267 = vsel %vm270, %v1262, %v1266
        %v1268 = vshrl.u32 %v1231, 16
        %v1270 = vrot.slane %v1268, 4
        %v1271 = vor.u32 %v1270, %v1266
        %v1272 = vrot.slane %v1271, 4
        %v1274 = vshll.u32 %v1232, 16
        %v1276 = vrot.slane %v1274, 5
        %v1277 = vsel %vm270, %v1272, %v1276
        %v1279 = vshrl.u32 %v1233, 16
        %v1281 = vrot.slane %v1279, 4
        %v1282 = vshll.u32 %v1233, 16
        %v1284 = vrot.slane %v1282, 5
        %v1285 = vor.u32 %v1281, %v1284
        %v1286 = vrot.slane %v1285, 4
        %v1288 = vshll.u32 %v1234, 16
        %v1290 = vrot.slane %v1288, 5
        %v1291 = vsel %vm270, %v1286, %v1290
        %v1292 = vshrl.u32 %v1234, 16
        %v1294 = vrot.slane %v1292, 4
        %v1295 = vor.u32 %v1294, %v1290
        %v1296 = vrot.slane %v1295, 4
        %v1298 = vshll.u32 %v1235, 16
        %v1300 = vrot.slane %v1298, 5
        %v1301 = vsel %vm270, %v1296, %v1300
        %v1303 = vshrl.u32 %v1236, 16
        %v1305 = vrot.slane %v1303, 4
        %v1306 = vshll.u32 %v1236, 16
        %v1308 = vrot.slane %v1306, 5
        %v1309 = vor.u32 %v1305, %v1308
        %v1310 = vrot.slane %v1309, 4
        %v1312 = vshll.u32 %v1237, 16
        %v1314 = vrot.slane %v1312, 5
        %v1315 = vsel %vm270, %v1310, %v1314
        %v1316 = vshrl.u32 %v1237, 16
        %v1318 = vrot.slane %v1316, 4
        %v1319 = vor.u32 %v1318, %v1314
        %v1320 = vrot.slane %v1319, 4
        %v1322 = vshll.u32 %v1238, 16
        %v1324 = vrot.slane %v1322, 5
        %v1325 = vsel %vm270, %v1320, %v1324
        %v1327 = vshrl.u32 %v1239, 16
        %v1329 = vrot.slane %v1327, 4
        %v1330 = vshll.u32 %v1239, 16
        %v1332 = vrot.slane %v1330, 5
        %v1333 = vor.u32 %v1329, %v1332
        %v1334 = vrot.slane %v1333, 4
        %v1336 = vshll.u32 %v1240, 16
        %v1338 = vrot.slane %v1336, 5
        %v1339 = vsel %vm270, %v1334, %v1338
        %v1340 = vshrl.u32 %v1240, 16
        %v1342 = vrot.slane %v1340, 4
        %v1343 = vor.u32 %v1342, %v1338
        %v1344 = vrot.slane %v1343, 4
        %v1346 = vshll.u32 %v1241, 16
        %v1348 = vrot.slane %v1346, 5
        %v1349 = vsel %vm270, %v1344, %v1348
        %v1351 = vshrl.u32 %v1242, 16
        %v1353 = vrot.slane %v1351, 4
        %v1354 = vshll.u32 %v1242, 16
        %v1356 = vrot.slane %v1354, 5
        %v1357 = vor.u32 %v1353, %v1356
        %v1358 = vrot.slane %v1357, 4
        %v1360 = vshll.u32 %v1243, 16
        %v1362 = vrot.slane %v1360, 5
        %v1363 = vsel %vm270, %v1358, %v1362
        %v1364 = vshrl.u32 %v1243, 16
        %v1366 = vrot.slane %v1364, 4
        %v1367 = vor.u32 %v1366, %v1362
        %v1368 = vrot.slane %v1367, 4
        %v1370 = vshll.u32 %v1244, 16
        %v1372 = vrot.slane %v1370, 5
        %v1373 = vsel %vm270, %v1368, %v1372
        %v1375 = vshrl.u32 %v1245, 16
        %v1377 = vrot.slane %v1375, 4
        %v1378 = vshll.u32 %v1245, 16
        %v1380 = vrot.slane %v1378, 5
        %v1381 = vor.u32 %v1377, %v1380
        %v1382 = vrot.slane %v1381, 4
        %v1384 = vshll.u32 %v1246, 16
        %v1386 = vrot.slane %v1384, 5
        %v1387 = vsel %vm270, %v1382, %v1386
        %v1388 = vshrl.u32 %v1246, 16
        %v1390 = vrot.slane %v1388, 4
        %v1391 = vor.u32 %v1390, %v1386
        %v1392 = vrot.slane %v1391, 4
        %v1394 = vshll.u32 %v1247, 16
        %v1396 = vrot.slane %v1394, 5
        %v1397 = vsel %vm270, %v1392, %v1396
        %v1399 = vshrl.u32 %v1248, 16
        %v1401 = vrot.slane %v1399, 4
        %v1402 = vshll.u32 %v1248, 16
        %v1404 = vrot.slane %v1402, 5
        %v1405 = vor.u32 %v1401, %v1404
        %v1406 = vrot.slane %v1405, 4
        %v1408 = vshll.u32 %v1249, 16
        %v1410 = vrot.slane %v1408, 5
        %v1411 = vsel %vm270, %v1406, %v1410
        %v1412 = vshrl.u32 %v1249, 16
        %v1414 = vrot.slane %v1412, 4
        %v1415 = vor.u32 %v1414, %v1410
        %v1416 = vrot.slane %v1415, 4
        %v1418 = vshll.u32 %v1250, 16
        %v1420 = vrot.slane %v1418, 5
        %v1421 = vsel %vm270, %v1416, %v1420
        %v1423 = vshrl.u32 %v1251, 16
        %v1425 = vrot.slane %v1423, 4
        %v1426 = vshll.u32 %v1251, 16
        %v1428 = vrot.slane %v1426, 5
        %v1429 = vor.u32 %v1425, %v1428
        %v1430 = vrot.slane %v1429, 4
        %v1432 = vshll.u32 %v1252, 16
        %v1434 = vrot.slane %v1432, 5
        %v1435 = vsel %vm270, %v1430, %v1434
        %v1436 = vshrl.u32 %v1252, 16
        %v1438 = vrot.slane %v1436, 4
        %v1439 = vor.u32 %v1438, %v1434
        %v1440 = vrot.slane %v1439, 4
        %v1442 = vshll.u32 %v1253, 16
        %v1444 = vrot.slane %v1442, 5
        %v1445 = vsel %vm270, %v1440, %v1444
        %s1446 = scalar_lea.vmem %s1, 8
        %v1447 = vld [vmem:[%s1446] sm:$0x3]
        %v1448 = vunpack.c.l.b16 %v1267
        %v1449 = vunpack.c.l.b16 %v1277
        %v1450 = vunpack.c.l.b16 %v1291
        %v1451 = vunpack.c.l.b16 %v1301
        %v1452 = vunpack.c.l.b16 %v1315
        %v1453 = vunpack.c.l.b16 %v1325
        %v1454 = vunpack.c.l.b16 %v1339
        %v1455 = vunpack.c.l.b16 %v1349
        %v1456 = vunpack.c.l.b16 %v1363
        %v1457 = vunpack.c.l.b16 %v1373
        %v1458 = vunpack.c.l.b16 %v1387
        %v1459 = vunpack.c.l.b16 %v1397
        %v1460 = vunpack.c.l.b16 %v1411
        %v1461 = vunpack.c.l.b16 %v1421
        %v1462 = vunpack.c.l.b16 %v1435
        %v1463 = vunpack.c.l.b16 %v1445
        %v1464 = vpack.c.b16 %v1449, %v1448
        %v1465 = vpack.c.b16 %v1451, %v1450
        %v1466 = vpack.c.b16 %v1453, %v1452
        %v1467 = vpack.c.b16 %v1455, %v1454
        %v1468 = vpack.c.b16 %v1457, %v1456
        %v1469 = vpack.c.b16 %v1459, %v1458
        %v1470 = vpack.c.b16 %v1461, %v1460
        %v1471 = vpack.c.b16 %v1463, %v1462
        %v1473 = vsel %vm489, %v1464, 0
        %v1476 = vsel %vm489, %v1465, 0
        %v1479 = vsel %vm489, %v1466, 0
        %v1482 = vsel %vm489, %v1467, 0
        %v1485 = vsel %vm489, %v1468, 0
        %v1488 = vsel %vm489, %v1469, 0
        %v1491 = vsel %vm489, %v1470, 0
        %v1494 = vsel %vm489, %v1471, 0
        %v1497 = vsel %vm514, %v1447, 0
        %1499 = vmatprep.subr.bf16.mxu0 0
        %1500 = vmatpush1.bf16.msra.mxu0 %v1497
        %1501 = vmatprep.subr.bf16.mxu0 0
        %1502 = vmatpush1.bf16.msra.mxu0 0
        %1503 = vmatprep.subr.bf16.mxu0 0
        %1504 = vmatpush1.bf16.msra.mxu0 0
        %1505 = vmatprep.subr.bf16.mxu0 0
        %1506 = vmatpush1.bf16.msra.mxu0 0
        %1507 = vmatprep.subr.bf16.mxu0 0
        %1508 = vmatpush1.bf16.msra.mxu0 0
        %1509 = vmatprep.subr.bf16.mxu0 0
        %1510 = vmatpush1.bf16.msra.mxu0 0
        %1511 = vmatprep.subr.bf16.mxu0 0
        %1512 = vmatpush1.bf16.msra.mxu0 0
        %1513 = vmatprep.subr.bf16.mxu0 0
        %1514 = vmatpush1.bf16.msra.mxu0 0
        %1515 = vmatprep.subr.bf16.mxu0 0
        %1516 = vmatpush1.bf16.msra.mxu0 0
        %1517 = vmatprep.subr.bf16.mxu0 0
        %1518 = vmatpush1.bf16.msra.mxu0 0
        %1519 = vmatprep.subr.bf16.mxu0 0
        %1520 = vmatpush1.bf16.msra.mxu0 0
        %1521 = vmatprep.subr.bf16.mxu0 0
        %1522 = vmatpush1.bf16.msra.mxu0 0
        %1523 = vmatprep.subr.bf16.mxu0 0
        %1524 = vmatpush1.bf16.msra.mxu0 0
        %1525 = vmatprep.subr.bf16.mxu0 0
        %1526 = vmatpush1.bf16.msra.mxu0 0
        %1527 = vmatprep.subr.bf16.mxu0 0
        %1528 = vmatpush1.bf16.msra.mxu0 0
        %1529 = vmatprep.subr.bf16.mxu0 0
        %1530 = vmatpush1.bf16.msra.mxu0 0
        %1531 = vmatprep.mubr.bf16.mxu0 0
        %1532 = vmatmul.mubr.bf16.gmra.mrb[0].mxu0 %v1473
        %v1533 = vpop.f32.mrb[0].mxu0
        %v1534 = vadd.f32 0.0, %v1533
        %v1535 = vpop.f32.mrb[0].mxu0
        %v1536 = vpop.f32.mrb[0].mxu0
        %v1537 = vadd.f32 0.0, %v1536
        %v1538 = vpop.f32.mrb[0].mxu0
        %1539 = vmatprep.mubr.bf16.mxu0 0
        %1540 = vmatmul.mubr.bf16.gmra.mrb[0].mxu0 %v1476
        %v1541 = vpop.f32.mrb[0].mxu0
        %v1542 = vadd.f32 0.0, %v1541
        %v1543 = vpop.f32.mrb[0].mxu0
        %v1544 = vpop.f32.mrb[0].mxu0
        %v1545 = vadd.f32 0.0, %v1544
        %v1546 = vpop.f32.mrb[0].mxu0
        %1547 = vmatprep.mubr.bf16.mxu0 0
        %1548 = vmatmul.mubr.bf16.gmra.mrb[0].mxu0 %v1479
        %v1549 = vpop.f32.mrb[0].mxu0
        %v1550 = vadd.f32 0.0, %v1549
        %v1551 = vpop.f32.mrb[0].mxu0
        %v1552 = vpop.f32.mrb[0].mxu0
        %v1553 = vadd.f32 0.0, %v1552
        %v1554 = vpop.f32.mrb[0].mxu0
        %1555 = vmatprep.mubr.bf16.mxu0 0
        %1556 = vmatmul.mubr.bf16.gmra.mrb[0].mxu0 %v1482
        %v1557 = vpop.f32.mrb[0].mxu0
        %v1558 = vadd.f32 0.0, %v1557
        %v1559 = vpop.f32.mrb[0].mxu0
        %v1560 = vpop.f32.mrb[0].mxu0
        %v1561 = vadd.f32 0.0, %v1560
        %v1562 = vpop.f32.mrb[0].mxu0
        %1563 = vmatprep.mubr.bf16.mxu0 0
        %1564 = vmatmul.mubr.bf16.gmra.mrb[0].mxu0 %v1485
        %v1565 = vpop.f32.mrb[0].mxu0
        %v1566 = vadd.f32 0.0, %v1565
        %v1567 = vpop.f32.mrb[0].mxu0
        %v1568 = vpop.f32.mrb[0].mxu0
        %v1569 = vadd.f32 0.0, %v1568
        %v1570 = vpop.f32.mrb[0].mxu0
        %1571 = vmatprep.mubr.bf16.mxu0 0
        %1572 = vmatmul.mubr.bf16.gmra.mrb[0].mxu0 %v1488
        %v1573 = vpop.f32.mrb[0].mxu0
        %v1574 = vadd.f32 0.0, %v1573
        %v1575 = vpop.f32.mrb[0].mxu0
        %v1576 = vpop.f32.mrb[0].mxu0
        %v1577 = vadd.f32 0.0, %v1576
        %v1578 = vpop.f32.mrb[0].mxu0
        %1579 = vmatprep.mubr.bf16.mxu0 0
        %1580 = vmatmul.mubr.bf16.gmra.mrb[0].mxu0 %v1491
        %v1581 = vpop.f32.mrb[0].mxu0
        %v1582 = vadd.f32 0.0, %v1581
        %v1583 = vpop.f32.mrb[0].mxu0
        %v1584 = vpop.f32.mrb[0].mxu0
        %v1585 = vadd.f32 0.0, %v1584
        %v1586 = vpop.f32.mrb[0].mxu0
        %1587 = vmatprep.mubr.bf16.mxu0 0
        %1588 = vmatmul.mubr.bf16.gmra.mrb[0].mxu0 %v1494
        %v1589 = vpop.f32.mrb[0].mxu0
        %v1590 = vadd.f32 0.0, %v1589
        %v1591 = vpop.f32.mrb[0].mxu0
        %v1592 = vpop.f32.mrb[0].mxu0
        %v1593 = vadd.f32 0.0, %v1592
        %v1594 = vpop.f32.mrb[0].mxu0
        %1595 = vdwg.mxu0
        %v1596 = vadd.f32 %v1214, %v1534
        %v1597 = vadd.f32 %v1215, %v1537
        %v1598 = vadd.f32 %v1216, %v1542
        %v1599 = vadd.f32 %v1217, %v1545
        %v1600 = vadd.f32 %v1218, %v1550
        %v1601 = vadd.f32 %v1219, %v1553
        %v1602 = vadd.f32 %v1220, %v1558
        %v1603 = vadd.f32 %v1221, %v1561
        %v1604 = vadd.f32 %v1222, %v1566
        %v1605 = vadd.f32 %v1223, %v1569
        %v1606 = vadd.f32 %v1224, %v1574
        %v1607 = vadd.f32 %v1225, %v1577
        %v1608 = vadd.f32 %v1226, %v1582
        %v1609 = vadd.f32 %v1227, %v1585
        %v1610 = vadd.f32 %v1228, %v1590
        %v1611 = vadd.f32 %v1229, %v1593
        %v1612 = vld [vmem:[%s1031] sm:$0xe]
        %v1613 = vld [vmem:[%s1031 + $0xc] sm:$0xe]
        %v1614 = vld [vmem:[%s1031 + $0x18] sm:$0xe]
        %v1615 = vld [vmem:[%s1031 + $0x24] sm:$0xe]
        %v1616 = vld [vmem:[%s1031 + $0x30] sm:$0xe]
        %v1617 = vld [vmem:[%s1031 + $0x3c] sm:$0xe]
        %v1618 = vld [vmem:[%s1031 + $0x48] sm:$0xe]
        %v1619 = vld [vmem:[%s1031 + $0x54] sm:$0xe]
        %v1644 = vrot.slane %v1612, 5
        %v1645 = vrot.slane %v1644, 4
        %v1646 = vrot.slane %v1231, 5
        %v1647 = vsel %vm805, %v1645, %v1646
        %v1648 = vrot.slane %v1646, 4
        %v1649 = vrot.slane %v1232, 5
        %v1650 = vsel %vm805, %v1648, %v1649
        %v1651 = vrot.slane %v1613, 5
        %v1652 = vrot.slane %v1651, 4
        %v1653 = vrot.slane %v1234, 5
        %v1654 = vsel %vm805, %v1652, %v1653
        %v1655 = vrot.slane %v1653, 4
        %v1656 = vrot.slane %v1235, 5
        %v1657 = vsel %vm805, %v1655, %v1656
        %v1658 = vrot.slane %v1614, 5
        %v1659 = vrot.slane %v1658, 4
        %v1660 = vrot.slane %v1237, 5
        %v1661 = vsel %vm805, %v1659, %v1660
        %v1662 = vrot.slane %v1660, 4
        %v1663 = vrot.slane %v1238, 5
        %v1664 = vsel %vm805, %v1662, %v1663
        %v1665 = vrot.slane %v1615, 5
        %v1666 = vrot.slane %v1665, 4
        %v1667 = vrot.slane %v1240, 5
        %v1668 = vsel %vm805, %v1666, %v1667
        %v1669 = vrot.slane %v1667, 4
        %v1670 = vrot.slane %v1241, 5
        %v1671 = vsel %vm805, %v1669, %v1670
        %v1672 = vrot.slane %v1616, 5
        %v1673 = vrot.slane %v1672, 4
        %v1674 = vrot.slane %v1243, 5
        %v1675 = vsel %vm805, %v1673, %v1674
        %v1676 = vrot.slane %v1674, 4
        %v1677 = vrot.slane %v1244, 5
        %v1678 = vsel %vm805, %v1676, %v1677
        %v1679 = vrot.slane %v1617, 5
        %v1680 = vrot.slane %v1679, 4
        %v1681 = vrot.slane %v1246, 5
        %v1682 = vsel %vm805, %v1680, %v1681
        %v1683 = vrot.slane %v1681, 4
        %v1684 = vrot.slane %v1247, 5
        %v1685 = vsel %vm805, %v1683, %v1684
        %v1686 = vrot.slane %v1618, 5
        %v1687 = vrot.slane %v1686, 4
        %v1688 = vrot.slane %v1249, 5
        %v1689 = vsel %vm805, %v1687, %v1688
        %v1690 = vrot.slane %v1688, 4
        %v1691 = vrot.slane %v1250, 5
        %v1692 = vsel %vm805, %v1690, %v1691
        %v1693 = vrot.slane %v1619, 5
        %v1694 = vrot.slane %v1693, 4
        %v1695 = vrot.slane %v1252, 5
        %v1696 = vsel %vm805, %v1694, %v1695
        %v1697 = vrot.slane %v1695, 4
        %v1698 = vrot.slane %v1253, 5
        %v1699 = vsel %vm805, %v1697, %v1698
        %s1700 = scalar_lea.vmem %s1, 10
        %v1701 = vld [vmem:[%s1700] sm:$0x3]
        %v1702 = vunpack.c.l.b16 %v1647
        %v1703 = vunpack.c.l.b16 %v1650
        %v1704 = vunpack.c.l.b16 %v1654
        %v1705 = vunpack.c.l.b16 %v1657
        %v1706 = vunpack.c.l.b16 %v1661
        %v1707 = vunpack.c.l.b16 %v1664
        %v1708 = vunpack.c.l.b16 %v1668
        %v1709 = vunpack.c.l.b16 %v1671
        %v1710 = vunpack.c.l.b16 %v1675
        %v1711 = vunpack.c.l.b16 %v1678
        %v1712 = vunpack.c.l.b16 %v1682
        %v1713 = vunpack.c.l.b16 %v1685
        %v1714 = vunpack.c.l.b16 %v1689
        %v1715 = vunpack.c.l.b16 %v1692
        %v1716 = vunpack.c.l.b16 %v1696
        %v1717 = vunpack.c.l.b16 %v1699
        %v1718 = vpack.c.b16 %v1703, %v1702
        %v1719 = vpack.c.b16 %v1705, %v1704
        %v1720 = vpack.c.b16 %v1707, %v1706
        %v1721 = vpack.c.b16 %v1709, %v1708
        %v1722 = vpack.c.b16 %v1711, %v1710
        %v1723 = vpack.c.b16 %v1713, %v1712
        %v1724 = vpack.c.b16 %v1715, %v1714
        %v1725 = vpack.c.b16 %v1717, %v1716
        %v1727 = vsel %vm489, %v1718, 0
        %v1730 = vsel %vm489, %v1719, 0
        %v1733 = vsel %vm489, %v1720, 0
        %v1736 = vsel %vm489, %v1721, 0
        %v1739 = vsel %vm489, %v1722, 0
        %v1742 = vsel %vm489, %v1723, 0
        %v1745 = vsel %vm489, %v1724, 0
        %v1748 = vsel %vm489, %v1725, 0
        %v1751 = vsel %vm514, %v1701, 0
        %1753 = vmatprep.subr.bf16.mxu0 0
        %1754 = vmatpush1.bf16.msra.mxu0 %v1751
        %1755 = vmatprep.subr.bf16.mxu0 0
        %1756 = vmatpush1.bf16.msra.mxu0 0
        %1757 = vmatprep.subr.bf16.mxu0 0
        %1758 = vmatpush1.bf16.msra.mxu0 0
        %1759 = vmatprep.subr.bf16.mxu0 0
        %1760 = vmatpush1.bf16.msra.mxu0 0
        %1761 = vmatprep.subr.bf16.mxu0 0
        %1762 = vmatpush1.bf16.msra.mxu0 0
        %1763 = vmatprep.subr.bf16.mxu0 0
        %1764 = vmatpush1.bf16.msra.mxu0 0
        %1765 = vmatprep.subr.bf16.mxu0 0
        %1766 = vmatpush1.bf16.msra.mxu0 0
        %1767 = vmatprep.subr.bf16.mxu0 0
        %1768 = vmatpush1.bf16.msra.mxu0 0
        %1769 = vmatprep.subr.bf16.mxu0 0
        %1770 = vmatpush1.bf16.msra.mxu0 0
        %1771 = vmatprep.subr.bf16.mxu0 0
        %1772 = vmatpush1.bf16.msra.mxu0 0
        %1773 = vmatprep.subr.bf16.mxu0 0
        %1774 = vmatpush1.bf16.msra.mxu0 0
        %1775 = vmatprep.subr.bf16.mxu0 0
        %1776 = vmatpush1.bf16.msra.mxu0 0
        %1777 = vmatprep.subr.bf16.mxu0 0
        %1778 = vmatpush1.bf16.msra.mxu0 0
        %1779 = vmatprep.subr.bf16.mxu0 0
        %1780 = vmatpush1.bf16.msra.mxu0 0
        %1781 = vmatprep.subr.bf16.mxu0 0
        %1782 = vmatpush1.bf16.msra.mxu0 0
        %1783 = vmatprep.subr.bf16.mxu0 0
        %1784 = vmatpush1.bf16.msra.mxu0 0
        %1785 = vmatprep.mubr.bf16.mxu0 0
        %1786 = vmatmul.mubr.bf16.gmra.mrb[0].mxu0 %v1727
        %v1787 = vpop.f32.mrb[0].mxu0
        %v1788 = vadd.f32 0.0, %v1787
        %v1789 = vpop.f32.mrb[0].mxu0
        %v1790 = vpop.f32.mrb[0].mxu0
        %v1791 = vadd.f32 0.0, %v1790
        %v1792 = vpop.f32.mrb[0].mxu0
        %1793 = vmatprep.mubr.bf16.mxu0 0
        %1794 = vmatmul.mubr.bf16.gmra.mrb[0].mxu0 %v1730
        %v1795 = vpop.f32.mrb[0].mxu0
        %v1796 = vadd.f32 0.0, %v1795
        %v1797 = vpop.f32.mrb[0].mxu0
        %v1798 = vpop.f32.mrb[0].mxu0
        %v1799 = vadd.f32 0.0, %v1798
        %v1800 = vpop.f32.mrb[0].mxu0
        %1801 = vmatprep.mubr.bf16.mxu0 0
        %1802 = vmatmul.mubr.bf16.gmra.mrb[0].mxu0 %v1733
        %v1803 = vpop.f32.mrb[0].mxu0
        %v1804 = vadd.f32 0.0, %v1803
        %v1805 = vpop.f32.mrb[0].mxu0
        %v1806 = vpop.f32.mrb[0].mxu0
        %v1807 = vadd.f32 0.0, %v1806
        %v1808 = vpop.f32.mrb[0].mxu0
        %1809 = vmatprep.mubr.bf16.mxu0 0
        %1810 = vmatmul.mubr.bf16.gmra.mrb[0].mxu0 %v1736
        %v1811 = vpop.f32.mrb[0].mxu0
        %v1812 = vadd.f32 0.0, %v1811
        %v1813 = vpop.f32.mrb[0].mxu0
        %v1814 = vpop.f32.mrb[0].mxu0
        %v1815 = vadd.f32 0.0, %v1814
        %v1816 = vpop.f32.mrb[0].mxu0
        %1817 = vmatprep.mubr.bf16.mxu0 0
        %1818 = vmatmul.mubr.bf16.gmra.mrb[0].mxu0 %v1739
        %v1819 = vpop.f32.mrb[0].mxu0
        %v1820 = vadd.f32 0.0, %v1819
        %v1821 = vpop.f32.mrb[0].mxu0
        %v1822 = vpop.f32.mrb[0].mxu0
        %v1823 = vadd.f32 0.0, %v1822
        %v1824 = vpop.f32.mrb[0].mxu0
        %1825 = vmatprep.mubr.bf16.mxu0 0
        %1826 = vmatmul.mubr.bf16.gmra.mrb[0].mxu0 %v1742
        %v1827 = vpop.f32.mrb[0].mxu0
        %v1828 = vadd.f32 0.0, %v1827
        %v1829 = vpop.f32.mrb[0].mxu0
        %v1830 = vpop.f32.mrb[0].mxu0
        %v1831 = vadd.f32 0.0, %v1830
        %v1832 = vpop.f32.mrb[0].mxu0
        %1833 = vmatprep.mubr.bf16.mxu0 0
        %1834 = vmatmul.mubr.bf16.gmra.mrb[0].mxu0 %v1745
        %v1835 = vpop.f32.mrb[0].mxu0
        %v1836 = vadd.f32 0.0, %v1835
        %v1837 = vpop.f32.mrb[0].mxu0
        %v1838 = vpop.f32.mrb[0].mxu0
        %v1839 = vadd.f32 0.0, %v1838
        %v1840 = vpop.f32.mrb[0].mxu0
        %1841 = vmatprep.mubr.bf16.mxu0 0
        %1842 = vmatmul.mubr.bf16.gmra.mrb[0].mxu0 %v1748
        %v1843 = vpop.f32.mrb[0].mxu0
        %v1844 = vadd.f32 0.0, %v1843
        %v1845 = vpop.f32.mrb[0].mxu0
        %v1846 = vpop.f32.mrb[0].mxu0
        %v1847 = vadd.f32 0.0, %v1846
        %v1848 = vpop.f32.mrb[0].mxu0
        %1849 = vdwg.mxu0
        %v1850 = vadd.f32 %v1596, %v1788
        %v1851 = vadd.f32 %v1597, %v1791
        %v1852 = vadd.f32 %v1598, %v1796
        %v1853 = vadd.f32 %v1599, %v1799
        %v1854 = vadd.f32 %v1600, %v1804
        %v1855 = vadd.f32 %v1601, %v1807
        %v1856 = vadd.f32 %v1602, %v1812
        %v1857 = vadd.f32 %v1603, %v1815
        %v1858 = vadd.f32 %v1604, %v1820
        %v1859 = vadd.f32 %v1605, %v1823
        %v1860 = vadd.f32 %v1606, %v1828
        %v1861 = vadd.f32 %v1607, %v1831
        %v1862 = vadd.f32 %v1608, %v1836
        %v1863 = vadd.f32 %v1609, %v1839
        %v1864 = vadd.f32 %v1610, %v1844
        %v1865 = vadd.f32 %v1611, %v1847
        %s1866 = sadd.s32 %s239, 2
        %s1867 = smul.u32 %s1866, 3
        %s1868 = smul.addr %s1867, 4
        %s1869 = scalar_lea.vmem %s236, %s1868
        %v1870 = vld [vmem:[%s1869] sm:$0xf]
        %v1871 = vld [vmem:[%s1869 + $0x4] sm:$0xf]
        %v1872 = vld [vmem:[%s1869 + $0xc] sm:$0xf]
        %v1873 = vld [vmem:[%s1869 + $0x10] sm:$0xf]
        %v1874 = vld [vmem:[%s1869 + $0x18] sm:$0xf]
        %v1875 = vld [vmem:[%s1869 + $0x1c] sm:$0xf]
        %v1876 = vld [vmem:[%s1869 + $0x24] sm:$0xf]
        %v1877 = vld [vmem:[%s1869 + $0x28] sm:$0xf]
        %v1878 = vld [vmem:[%s1869 + $0x30] sm:$0xf]
        %v1879 = vld [vmem:[%s1869 + $0x34] sm:$0xf]
        %v1880 = vld [vmem:[%s1869 + $0x3c] sm:$0xf]
        %v1881 = vld [vmem:[%s1869 + $0x40] sm:$0xf]
        %v1882 = vld [vmem:[%s1869 + $0x48] sm:$0xf]
        %v1883 = vld [vmem:[%s1869 + $0x4c] sm:$0xf]
        %v1884 = vld [vmem:[%s1869 + $0x54] sm:$0xf]
        %v1885 = vld [vmem:[%s1869 + $0x58] sm:$0xf]
        %s1886 = scalar_lea.vmem %s1, 12
        %v1887 = vld [vmem:[%s1886] sm:$0x3]
        %v1904 = vunpack.c.l.b16 %v1870
        %v1905 = vunpack.c.l.b16 %v1871
        %v1906 = vunpack.c.l.b16 %v1872
        %v1907 = vunpack.c.l.b16 %v1873
        %v1908 = vunpack.c.l.b16 %v1874
        %v1909 = vunpack.c.l.b16 %v1875
        %v1910 = vunpack.c.l.b16 %v1876
        %v1911 = vunpack.c.l.b16 %v1877
        %v1912 = vunpack.c.l.b16 %v1878
        %v1913 = vunpack.c.l.b16 %v1879
        %v1914 = vunpack.c.l.b16 %v1880
        %v1915 = vunpack.c.l.b16 %v1881
        %v1916 = vunpack.c.l.b16 %v1882
        %v1917 = vunpack.c.l.b16 %v1883
        %v1918 = vunpack.c.l.b16 %v1884
        %v1919 = vunpack.c.l.b16 %v1885
        %v1920 = vpack.c.b16 %v1905, %v1904
        %v1921 = vpack.c.b16 %v1907, %v1906
        %v1922 = vpack.c.b16 %v1909, %v1908
        %v1923 = vpack.c.b16 %v1911, %v1910
        %v1924 = vpack.c.b16 %v1913, %v1912
        %v1925 = vpack.c.b16 %v1915, %v1914
        %v1926 = vpack.c.b16 %v1917, %v1916
        %v1927 = vpack.c.b16 %v1919, %v1918
        %v1929 = vsel %vm489, %v1920, 0
        %v1932 = vsel %vm489, %v1921, 0
        %v1935 = vsel %vm489, %v1922, 0
        %v1938 = vsel %vm489, %v1923, 0
        %v1941 = vsel %vm489, %v1924, 0
        %v1944 = vsel %vm489, %v1925, 0
        %v1947 = vsel %vm489, %v1926, 0
        %v1950 = vsel %vm489, %v1927, 0
        %v1953 = vsel %vm514, %v1887, 0
        %1955 = vmatprep.subr.bf16.mxu0 0
        %1956 = vmatpush1.bf16.msra.mxu0 %v1953
        %1957 = vmatprep.subr.bf16.mxu0 0
        %1958 = vmatpush1.bf16.msra.mxu0 0
        %1959 = vmatprep.subr.bf16.mxu0 0
        %1960 = vmatpush1.bf16.msra.mxu0 0
        %1961 = vmatprep.subr.bf16.mxu0 0
        %1962 = vmatpush1.bf16.msra.mxu0 0
        %1963 = vmatprep.subr.bf16.mxu0 0
        %1964 = vmatpush1.bf16.msra.mxu0 0
        %1965 = vmatprep.subr.bf16.mxu0 0
        %1966 = vmatpush1.bf16.msra.mxu0 0
        %1967 = vmatprep.subr.bf16.mxu0 0
        %1968 = vmatpush1.bf16.msra.mxu0 0
        %1969 = vmatprep.subr.bf16.mxu0 0
        %1970 = vmatpush1.bf16.msra.mxu0 0
        %1971 = vmatprep.subr.bf16.mxu0 0
        %1972 = vmatpush1.bf16.msra.mxu0 0
        %1973 = vmatprep.subr.bf16.mxu0 0
        %1974 = vmatpush1.bf16.msra.mxu0 0
        %1975 = vmatprep.subr.bf16.mxu0 0
        %1976 = vmatpush1.bf16.msra.mxu0 0
        %1977 = vmatprep.subr.bf16.mxu0 0
        %1978 = vmatpush1.bf16.msra.mxu0 0
        %1979 = vmatprep.subr.bf16.mxu0 0
        %1980 = vmatpush1.bf16.msra.mxu0 0
        %1981 = vmatprep.subr.bf16.mxu0 0
        %1982 = vmatpush1.bf16.msra.mxu0 0
        %1983 = vmatprep.subr.bf16.mxu0 0
        %1984 = vmatpush1.bf16.msra.mxu0 0
        %1985 = vmatprep.subr.bf16.mxu0 0
        %1986 = vmatpush1.bf16.msra.mxu0 0
        %1987 = vmatprep.mubr.bf16.mxu0 0
        %1988 = vmatmul.mubr.bf16.gmra.mrb[0].mxu0 %v1929
        %v1989 = vpop.f32.mrb[0].mxu0
        %v1990 = vadd.f32 0.0, %v1989
        %v1991 = vpop.f32.mrb[0].mxu0
        %v1992 = vpop.f32.mrb[0].mxu0
        %v1993 = vadd.f32 0.0, %v1992
        %v1994 = vpop.f32.mrb[0].mxu0
        %1995 = vmatprep.mubr.bf16.mxu0 0
        %1996 = vmatmul.mubr.bf16.gmra.mrb[0].mxu0 %v1932
        %v1997 = vpop.f32.mrb[0].mxu0
        %v1998 = vadd.f32 0.0, %v1997
        %v1999 = vpop.f32.mrb[0].mxu0
        %v2000 = vpop.f32.mrb[0].mxu0
        %v2001 = vadd.f32 0.0, %v2000
        %v2002 = vpop.f32.mrb[0].mxu0
        %2003 = vmatprep.mubr.bf16.mxu0 0
        %2004 = vmatmul.mubr.bf16.gmra.mrb[0].mxu0 %v1935
        %v2005 = vpop.f32.mrb[0].mxu0
        %v2006 = vadd.f32 0.0, %v2005
        %v2007 = vpop.f32.mrb[0].mxu0
        %v2008 = vpop.f32.mrb[0].mxu0
        %v2009 = vadd.f32 0.0, %v2008
        %v2010 = vpop.f32.mrb[0].mxu0
        %2011 = vmatprep.mubr.bf16.mxu0 0
        %2012 = vmatmul.mubr.bf16.gmra.mrb[0].mxu0 %v1938
        %v2013 = vpop.f32.mrb[0].mxu0
        %v2014 = vadd.f32 0.0, %v2013
        %v2015 = vpop.f32.mrb[0].mxu0
        %v2016 = vpop.f32.mrb[0].mxu0
        %v2017 = vadd.f32 0.0, %v2016
        %v2018 = vpop.f32.mrb[0].mxu0
        %2019 = vmatprep.mubr.bf16.mxu0 0
        %2020 = vmatmul.mubr.bf16.gmra.mrb[0].mxu0 %v1941
        %v2021 = vpop.f32.mrb[0].mxu0
        %v2022 = vadd.f32 0.0, %v2021
        %v2023 = vpop.f32.mrb[0].mxu0
        %v2024 = vpop.f32.mrb[0].mxu0
        %v2025 = vadd.f32 0.0, %v2024
        %v2026 = vpop.f32.mrb[0].mxu0
        %2027 = vmatprep.mubr.bf16.mxu0 0
        %2028 = vmatmul.mubr.bf16.gmra.mrb[0].mxu0 %v1944
        %v2029 = vpop.f32.mrb[0].mxu0
        %v2030 = vadd.f32 0.0, %v2029
        %v2031 = vpop.f32.mrb[0].mxu0
        %v2032 = vpop.f32.mrb[0].mxu0
        %v2033 = vadd.f32 0.0, %v2032
        %v2034 = vpop.f32.mrb[0].mxu0
        %2035 = vmatprep.mubr.bf16.mxu0 0
        %2036 = vmatmul.mubr.bf16.gmra.mrb[0].mxu0 %v1947
        %v2037 = vpop.f32.mrb[0].mxu0
        %v2038 = vadd.f32 0.0, %v2037
        %v2039 = vpop.f32.mrb[0].mxu0
        %v2040 = vpop.f32.mrb[0].mxu0
        %v2041 = vadd.f32 0.0, %v2040
        %v2042 = vpop.f32.mrb[0].mxu0
        %2043 = vmatprep.mubr.bf16.mxu0 0
        %2044 = vmatmul.mubr.bf16.gmra.mrb[0].mxu0 %v1950
        %v2045 = vpop.f32.mrb[0].mxu0
        %v2046 = vadd.f32 0.0, %v2045
        %v2047 = vpop.f32.mrb[0].mxu0
        %v2048 = vpop.f32.mrb[0].mxu0
        %v2049 = vadd.f32 0.0, %v2048
        %v2050 = vpop.f32.mrb[0].mxu0
        %2051 = vdwg.mxu0
        %v2052 = vadd.f32 %v1850, %v1990
        %v2053 = vadd.f32 %v1851, %v1993
        %v2054 = vadd.f32 %v1852, %v1998
        %v2055 = vadd.f32 %v1853, %v2001
        %v2056 = vadd.f32 %v1854, %v2006
        %v2057 = vadd.f32 %v1855, %v2009
        %v2058 = vadd.f32 %v1856, %v2014
        %v2059 = vadd.f32 %v1857, %v2017
        %v2060 = vadd.f32 %v1858, %v2022
        %v2061 = vadd.f32 %v1859, %v2025
        %v2062 = vadd.f32 %v1860, %v2030
        %v2063 = vadd.f32 %v1861, %v2033
        %v2064 = vadd.f32 %v1862, %v2038
        %v2065 = vadd.f32 %v1863, %v2041
        %v2066 = vadd.f32 %v1864, %v2046
        %v2067 = vadd.f32 %v1865, %v2049
        %v2068 = vld [vmem:[%s1869] sm:$0xf]
        %v2069 = vld [vmem:[%s1869 + $0x4] sm:$0xf]
        %v2070 = vld [vmem:[%s1869 + $0x8] sm:$0x1]
        %v2071 = vld [vmem:[%s1869 + $0xc] sm:$0xf]
        %v2072 = vld [vmem:[%s1869 + $0x10] sm:$0xf]
        %v2073 = vld [vmem:[%s1869 + $0x14] sm:$0x1]
        %v2074 = vld [vmem:[%s1869 + $0x18] sm:$0xf]
        %v2075 = vld [vmem:[%s1869 + $0x1c] sm:$0xf]
        %v2076 = vld [vmem:[%s1869 + $0x20] sm:$0x1]
        %v2077 = vld [vmem:[%s1869 + $0x24] sm:$0xf]
        %v2078 = vld [vmem:[%s1869 + $0x28] sm:$0xf]
        %v2079 = vld [vmem:[%s1869 + $0x2c] sm:$0x1]
        %v2080 = vld [vmem:[%s1869 + $0x30] sm:$0xf]
        %v2081 = vld [vmem:[%s1869 + $0x34] sm:$0xf]
        %v2082 = vld [vmem:[%s1869 + $0x38] sm:$0x1]
        %v2083 = vld [vmem:[%s1869 + $0x3c] sm:$0xf]
        %v2084 = vld [vmem:[%s1869 + $0x40] sm:$0xf]
        %v2085 = vld [vmem:[%s1869 + $0x44] sm:$0x1]
        %v2086 = vld [vmem:[%s1869 + $0x48] sm:$0xf]
        %v2087 = vld [vmem:[%s1869 + $0x4c] sm:$0xf]
        %v2088 = vld [vmem:[%s1869 + $0x50] sm:$0x1]
        %v2089 = vld [vmem:[%s1869 + $0x54] sm:$0xf]
        %v2090 = vld [vmem:[%s1869 + $0x58] sm:$0xf]
        %v2091 = vld [vmem:[%s1869 + $0x5c] sm:$0x1]
        %v2093 = vshrl.u32 %v2068, 16
        %v2095 = vrot.slane %v2093, 4
        %v2096 = vshll.u32 %v2068, 16
        %v2098 = vrot.slane %v2096, 5
        %v2099 = vor.u32 %v2095, %v2098
        %v2100 = vrot.slane %v2099, 4
        %v2102 = vshll.u32 %v2069, 16
        %v2104 = vrot.slane %v2102, 5
        %v2105 = vsel %vm270, %v2100, %v2104
        %v2106 = vshrl.u32 %v2069, 16
        %v2108 = vrot.slane %v2106, 4
        %v2109 = vor.u32 %v2108, %v2104
        %v2110 = vrot.slane %v2109, 4
        %v2112 = vshll.u32 %v2070, 16
        %v2114 = vrot.slane %v2112, 5
        %v2115 = vsel %vm270, %v2110, %v2114
        %v2117 = vshrl.u32 %v2071, 16
        %v2119 = vrot.slane %v2117, 4
        %v2120 = vshll.u32 %v2071, 16
        %v2122 = vrot.slane %v2120, 5
        %v2123 = vor.u32 %v2119, %v2122
        %v2124 = vrot.slane %v2123, 4
        %v2126 = vshll.u32 %v2072, 16
        %v2128 = vrot.slane %v2126, 5
        %v2129 = vsel %vm270, %v2124, %v2128
        %v2130 = vshrl.u32 %v2072, 16
        %v2132 = vrot.slane %v2130, 4
        %v2133 = vor.u32 %v2132, %v2128
        %v2134 = vrot.slane %v2133, 4
        %v2136 = vshll.u32 %v2073, 16
        %v2138 = vrot.slane %v2136, 5
        %v2139 = vsel %vm270, %v2134, %v2138
        %v2141 = vshrl.u32 %v2074, 16
        %v2143 = vrot.slane %v2141, 4
        %v2144 = vshll.u32 %v2074, 16
        %v2146 = vrot.slane %v2144, 5
        %v2147 = vor.u32 %v2143, %v2146
        %v2148 = vrot.slane %v2147, 4
        %v2150 = vshll.u32 %v2075, 16
        %v2152 = vrot.slane %v2150, 5
        %v2153 = vsel %vm270, %v2148, %v2152
        %v2154 = vshrl.u32 %v2075, 16
        %v2156 = vrot.slane %v2154, 4
        %v2157 = vor.u32 %v2156, %v2152
        %v2158 = vrot.slane %v2157, 4
        %v2160 = vshll.u32 %v2076, 16
        %v2162 = vrot.slane %v2160, 5
        %v2163 = vsel %vm270, %v2158, %v2162
        %v2165 = vshrl.u32 %v2077, 16
        %v2167 = vrot.slane %v2165, 4
        %v2168 = vshll.u32 %v2077, 16
        %v2170 = vrot.slane %v2168, 5
        %v2171 = vor.u32 %v2167, %v2170
        %v2172 = vrot.slane %v2171, 4
        %v2174 = vshll.u32 %v2078, 16
        %v2176 = vrot.slane %v2174, 5
        %v2177 = vsel %vm270, %v2172, %v2176
        %v2178 = vshrl.u32 %v2078, 16
        %v2180 = vrot.slane %v2178, 4
        %v2181 = vor.u32 %v2180, %v2176
        %v2182 = vrot.slane %v2181, 4
        %v2184 = vshll.u32 %v2079, 16
        %v2186 = vrot.slane %v2184, 5
        %v2187 = vsel %vm270, %v2182, %v2186
        %v2189 = vshrl.u32 %v2080, 16
        %v2191 = vrot.slane %v2189, 4
        %v2192 = vshll.u32 %v2080, 16
        %v2194 = vrot.slane %v2192, 5
        %v2195 = vor.u32 %v2191, %v2194
        %v2196 = vrot.slane %v2195, 4
        %v2198 = vshll.u32 %v2081, 16
        %v2200 = vrot.slane %v2198, 5
        %v2201 = vsel %vm270, %v2196, %v2200
        %v2202 = vshrl.u32 %v2081, 16
        %v2204 = vrot.slane %v2202, 4
        %v2205 = vor.u32 %v2204, %v2200
        %v2206 = vrot.slane %v2205, 4
        %v2208 = vshll.u32 %v2082, 16
        %v2210 = vrot.slane %v2208, 5
        %v2211 = vsel %vm270, %v2206, %v2210
        %v2213 = vshrl.u32 %v2083, 16
        %v2215 = vrot.slane %v2213, 4
        %v2216 = vshll.u32 %v2083, 16
        %v2218 = vrot.slane %v2216, 5
        %v2219 = vor.u32 %v2215, %v2218
        %v2220 = vrot.slane %v2219, 4
        %v2222 = vshll.u32 %v2084, 16
        %v2224 = vrot.slane %v2222, 5
        %v2225 = vsel %vm270, %v2220, %v2224
        %v2226 = vshrl.u32 %v2084, 16
        %v2228 = vrot.slane %v2226, 4
        %v2229 = vor.u32 %v2228, %v2224
        %v2230 = vrot.slane %v2229, 4
        %v2232 = vshll.u32 %v2085, 16
        %v2234 = vrot.slane %v2232, 5
        %v2235 = vsel %vm270, %v2230, %v2234
        %v2237 = vshrl.u32 %v2086, 16
        %v2239 = vrot.slane %v2237, 4
        %v2240 = vshll.u32 %v2086, 16
        %v2242 = vrot.slane %v2240, 5
        %v2243 = vor.u32 %v2239, %v2242
        %v2244 = vrot.slane %v2243, 4
        %v2246 = vshll.u32 %v2087, 16
        %v2248 = vrot.slane %v2246, 5
        %v2249 = vsel %vm270, %v2244, %v2248
        %v2250 = vshrl.u32 %v2087, 16
        %v2252 = vrot.slane %v2250, 4
        %v2253 = vor.u32 %v2252, %v2248
        %v2254 = vrot.slane %v2253, 4
        %v2256 = vshll.u32 %v2088, 16
        %v2258 = vrot.slane %v2256, 5
        %v2259 = vsel %vm270, %v2254, %v2258
        %v2261 = vshrl.u32 %v2089, 16
        %v2263 = vrot.slane %v2261, 4
        %v2264 = vshll.u32 %v2089, 16
        %v2266 = vrot.slane %v2264, 5
        %v2267 = vor.u32 %v2263, %v2266
        %v2268 = vrot.slane %v2267, 4
        %v2270 = vshll.u32 %v2090, 16
        %v2272 = vrot.slane %v2270, 5
        %v2273 = vsel %vm270, %v2268, %v2272
        %v2274 = vshrl.u32 %v2090, 16
        %v2276 = vrot.slane %v2274, 4
        %v2277 = vor.u32 %v2276, %v2272
        %v2278 = vrot.slane %v2277, 4
        %v2280 = vshll.u32 %v2091, 16
        %v2282 = vrot.slane %v2280, 5
        %v2283 = vsel %vm270, %v2278, %v2282
        %s2284 = scalar_lea.vmem %s1, 14
        %v2285 = vld [vmem:[%s2284] sm:$0x3]
        %v2286 = vunpack.c.l.b16 %v2105
        %v2287 = vunpack.c.l.b16 %v2115
        %v2288 = vunpack.c.l.b16 %v2129
        %v2289 = vunpack.c.l.b16 %v2139
        %v2290 = vunpack.c.l.b16 %v2153
        %v2291 = vunpack.c.l.b16 %v2163
        %v2292 = vunpack.c.l.b16 %v2177
        %v2293 = vunpack.c.l.b16 %v2187
        %v2294 = vunpack.c.l.b16 %v2201
        %v2295 = vunpack.c.l.b16 %v2211
        %v2296 = vunpack.c.l.b16 %v2225
        %v2297 = vunpack.c.l.b16 %v2235
        %v2298 = vunpack.c.l.b16 %v2249
        %v2299 = vunpack.c.l.b16 %v2259
        %v2300 = vunpack.c.l.b16 %v2273
        %v2301 = vunpack.c.l.b16 %v2283
        %v2302 = vpack.c.b16 %v2287, %v2286
        %v2303 = vpack.c.b16 %v2289, %v2288
        %v2304 = vpack.c.b16 %v2291, %v2290
        %v2305 = vpack.c.b16 %v2293, %v2292
        %v2306 = vpack.c.b16 %v2295, %v2294
        %v2307 = vpack.c.b16 %v2297, %v2296
        %v2308 = vpack.c.b16 %v2299, %v2298
        %v2309 = vpack.c.b16 %v2301, %v2300
        %v2311 = vsel %vm489, %v2302, 0
        %v2314 = vsel %vm489, %v2303, 0
        %v2317 = vsel %vm489, %v2304, 0
        %v2320 = vsel %vm489, %v2305, 0
        %v2323 = vsel %vm489, %v2306, 0
        %v2326 = vsel %vm489, %v2307, 0
        %v2329 = vsel %vm489, %v2308, 0
        %v2332 = vsel %vm489, %v2309, 0
        %v2335 = vsel %vm514, %v2285, 0
        %2337 = vmatprep.subr.bf16.mxu0 0
        %2338 = vmatpush1.bf16.msra.mxu0 %v2335
        %2339 = vmatprep.subr.bf16.mxu0 0
        %2340 = vmatpush1.bf16.msra.mxu0 0
        %2341 = vmatprep.subr.bf16.mxu0 0
        %2342 = vmatpush1.bf16.msra.mxu0 0
        %2343 = vmatprep.subr.bf16.mxu0 0
        %2344 = vmatpush1.bf16.msra.mxu0 0
        %2345 = vmatprep.subr.bf16.mxu0 0
        %2346 = vmatpush1.bf16.msra.mxu0 0
        %2347 = vmatprep.subr.bf16.mxu0 0
        %2348 = vmatpush1.bf16.msra.mxu0 0
        %2349 = vmatprep.subr.bf16.mxu0 0
        %2350 = vmatpush1.bf16.msra.mxu0 0
        %2351 = vmatprep.subr.bf16.mxu0 0
        %2352 = vmatpush1.bf16.msra.mxu0 0
        %2353 = vmatprep.subr.bf16.mxu0 0
        %2354 = vmatpush1.bf16.msra.mxu0 0
        %2355 = vmatprep.subr.bf16.mxu0 0
        %2356 = vmatpush1.bf16.msra.mxu0 0
        %2357 = vmatprep.subr.bf16.mxu0 0
        %2358 = vmatpush1.bf16.msra.mxu0 0
        %2359 = vmatprep.subr.bf16.mxu0 0
        %2360 = vmatpush1.bf16.msra.mxu0 0
        %2361 = vmatprep.subr.bf16.mxu0 0
        %2362 = vmatpush1.bf16.msra.mxu0 0
        %2363 = vmatprep.subr.bf16.mxu0 0
        %2364 = vmatpush1.bf16.msra.mxu0 0
        %2365 = vmatprep.subr.bf16.mxu0 0
        %2366 = vmatpush1.bf16.msra.mxu0 0
        %2367 = vmatprep.subr.bf16.mxu0 0
        %2368 = vmatpush1.bf16.msra.mxu0 0
        %2369 = vmatprep.mubr.bf16.mxu0 0
        %2370 = vmatmul.mubr.bf16.gmra.mrb[0].mxu0 %v2311
        %v2371 = vpop.f32.mrb[0].mxu0
        %v2372 = vadd.f32 0.0, %v2371
        %v2373 = vpop.f32.mrb[0].mxu0
        %v2374 = vpop.f32.mrb[0].mxu0
        %v2375 = vadd.f32 0.0, %v2374
        %v2376 = vpop.f32.mrb[0].mxu0
        %2377 = vmatprep.mubr.bf16.mxu0 0
        %2378 = vmatmul.mubr.bf16.gmra.mrb[0].mxu0 %v2314
        %v2379 = vpop.f32.mrb[0].mxu0
        %v2380 = vadd.f32 0.0, %v2379
        %v2381 = vpop.f32.mrb[0].mxu0
        %v2382 = vpop.f32.mrb[0].mxu0
        %v2383 = vadd.f32 0.0, %v2382
        %v2384 = vpop.f32.mrb[0].mxu0
        %2385 = vmatprep.mubr.bf16.mxu0 0
        %2386 = vmatmul.mubr.bf16.gmra.mrb[0].mxu0 %v2317
        %v2387 = vpop.f32.mrb[0].mxu0
        %v2388 = vadd.f32 0.0, %v2387
        %v2389 = vpop.f32.mrb[0].mxu0
        %v2390 = vpop.f32.mrb[0].mxu0
        %v2391 = vadd.f32 0.0, %v2390
        %v2392 = vpop.f32.mrb[0].mxu0
        %2393 = vmatprep.mubr.bf16.mxu0 0
        %2394 = vmatmul.mubr.bf16.gmra.mrb[0].mxu0 %v2320
        %v2395 = vpop.f32.mrb[0].mxu0
        %v2396 = vadd.f32 0.0, %v2395
        %v2397 = vpop.f32.mrb[0].mxu0
        %v2398 = vpop.f32.mrb[0].mxu0
        %v2399 = vadd.f32 0.0, %v2398
        %v2400 = vpop.f32.mrb[0].mxu0
        %2401 = vmatprep.mubr.bf16.mxu0 0
        %2402 = vmatmul.mubr.bf16.gmra.mrb[0].mxu0 %v2323
        %v2403 = vpop.f32.mrb[0].mxu0
        %v2404 = vadd.f32 0.0, %v2403
        %v2405 = vpop.f32.mrb[0].mxu0
        %v2406 = vpop.f32.mrb[0].mxu0
        %v2407 = vadd.f32 0.0, %v2406
        %v2408 = vpop.f32.mrb[0].mxu0
        %2409 = vmatprep.mubr.bf16.mxu0 0
        %2410 = vmatmul.mubr.bf16.gmra.mrb[0].mxu0 %v2326
        %v2411 = vpop.f32.mrb[0].mxu0
        %v2412 = vadd.f32 0.0, %v2411
        %v2413 = vpop.f32.mrb[0].mxu0
        %v2414 = vpop.f32.mrb[0].mxu0
        %v2415 = vadd.f32 0.0, %v2414
        %v2416 = vpop.f32.mrb[0].mxu0
        %2417 = vmatprep.mubr.bf16.mxu0 0
        %2418 = vmatmul.mubr.bf16.gmra.mrb[0].mxu0 %v2329
        %v2419 = vpop.f32.mrb[0].mxu0
        %v2420 = vadd.f32 0.0, %v2419
        %v2421 = vpop.f32.mrb[0].mxu0
        %v2422 = vpop.f32.mrb[0].mxu0
        %v2423 = vadd.f32 0.0, %v2422
        %v2424 = vpop.f32.mrb[0].mxu0
        %2425 = vmatprep.mubr.bf16.mxu0 0
        %2426 = vmatmul.mubr.bf16.gmra.mrb[0].mxu0 %v2332
        %v2427 = vpop.f32.mrb[0].mxu0
        %v2428 = vadd.f32 0.0, %v2427
        %v2429 = vpop.f32.mrb[0].mxu0
        %v2430 = vpop.f32.mrb[0].mxu0
        %v2431 = vadd.f32 0.0, %v2430
        %v2432 = vpop.f32.mrb[0].mxu0
        %2433 = vdwg.mxu0
        %v2434 = vadd.f32 %v2052, %v2372
        %v2435 = vadd.f32 %v2053, %v2375
        %v2436 = vadd.f32 %v2054, %v2380
        %v2437 = vadd.f32 %v2055, %v2383
        %v2438 = vadd.f32 %v2056, %v2388
        %v2439 = vadd.f32 %v2057, %v2391
        %v2440 = vadd.f32 %v2058, %v2396
        %v2441 = vadd.f32 %v2059, %v2399
        %v2442 = vadd.f32 %v2060, %v2404
        %v2443 = vadd.f32 %v2061, %v2407
        %v2444 = vadd.f32 %v2062, %v2412
        %v2445 = vadd.f32 %v2063, %v2415
        %v2446 = vadd.f32 %v2064, %v2420
        %v2447 = vadd.f32 %v2065, %v2423
        %v2448 = vadd.f32 %v2066, %v2428
        %v2449 = vadd.f32 %v2067, %v2431
        %v2450 = vld [vmem:[%s1869] sm:$0xe]
        %v2451 = vld [vmem:[%s1869 + $0xc] sm:$0xe]
        %v2452 = vld [vmem:[%s1869 + $0x18] sm:$0xe]
        %v2453 = vld [vmem:[%s1869 + $0x24] sm:$0xe]
        %v2454 = vld [vmem:[%s1869 + $0x30] sm:$0xe]
        %v2455 = vld [vmem:[%s1869 + $0x3c] sm:$0xe]
        %v2456 = vld [vmem:[%s1869 + $0x48] sm:$0xe]
        %v2457 = vld [vmem:[%s1869 + $0x54] sm:$0xe]
        %v2482 = vrot.slane %v2450, 5
        %v2483 = vrot.slane %v2482, 4
        %v2484 = vrot.slane %v2069, 5
        %v2485 = vsel %vm805, %v2483, %v2484
        %v2486 = vrot.slane %v2484, 4
        %v2487 = vrot.slane %v2070, 5
        %v2488 = vsel %vm805, %v2486, %v2487
        %v2489 = vrot.slane %v2451, 5
        %v2490 = vrot.slane %v2489, 4
        %v2491 = vrot.slane %v2072, 5
        %v2492 = vsel %vm805, %v2490, %v2491
        %v2493 = vrot.slane %v2491, 4
        %v2494 = vrot.slane %v2073, 5
        %v2495 = vsel %vm805, %v2493, %v2494
        %v2496 = vrot.slane %v2452, 5
        %v2497 = vrot.slane %v2496, 4
        %v2498 = vrot.slane %v2075, 5
        %v2499 = vsel %vm805, %v2497, %v2498
        %v2500 = vrot.slane %v2498, 4
        %v2501 = vrot.slane %v2076, 5
        %v2502 = vsel %vm805, %v2500, %v2501
        %v2503 = vrot.slane %v2453, 5
        %v2504 = vrot.slane %v2503, 4
        %v2505 = vrot.slane %v2078, 5
        %v2506 = vsel %vm805, %v2504, %v2505
        %v2507 = vrot.slane %v2505, 4
        %v2508 = vrot.slane %v2079, 5
        %v2509 = vsel %vm805, %v2507, %v2508
        %v2510 = vrot.slane %v2454, 5
        %v2511 = vrot.slane %v2510, 4
        %v2512 = vrot.slane %v2081, 5
        %v2513 = vsel %vm805, %v2511, %v2512
        %v2514 = vrot.slane %v2512, 4
        %v2515 = vrot.slane %v2082, 5
        %v2516 = vsel %vm805, %v2514, %v2515
        %v2517 = vrot.slane %v2455, 5
        %v2518 = vrot.slane %v2517, 4
        %v2519 = vrot.slane %v2084, 5
        %v2520 = vsel %vm805, %v2518, %v2519
        %v2521 = vrot.slane %v2519, 4
        %v2522 = vrot.slane %v2085, 5
        %v2523 = vsel %vm805, %v2521, %v2522
        %v2524 = vrot.slane %v2456, 5
        %v2525 = vrot.slane %v2524, 4
        %v2526 = vrot.slane %v2087, 5
        %v2527 = vsel %vm805, %v2525, %v2526
        %v2528 = vrot.slane %v2526, 4
        %v2529 = vrot.slane %v2088, 5
        %v2530 = vsel %vm805, %v2528, %v2529
        %v2531 = vrot.slane %v2457, 5
        %v2532 = vrot.slane %v2531, 4
        %v2533 = vrot.slane %v2090, 5
        %v2534 = vsel %vm805, %v2532, %v2533
        %v2535 = vrot.slane %v2533, 4
        %v2536 = vrot.slane %v2091, 5
        %v2537 = vsel %vm805, %v2535, %v2536
        %s2538 = scalar_lea.vmem %s1, 16
        %v2539 = vld [vmem:[%s2538] sm:$0x3]
        %v2540 = vunpack.c.l.b16 %v2485
        %v2541 = vunpack.c.l.b16 %v2488
        %v2542 = vunpack.c.l.b16 %v2492
        %v2543 = vunpack.c.l.b16 %v2495
        %v2544 = vunpack.c.l.b16 %v2499
        %v2545 = vunpack.c.l.b16 %v2502
        %v2546 = vunpack.c.l.b16 %v2506
        %v2547 = vunpack.c.l.b16 %v2509
        %v2548 = vunpack.c.l.b16 %v2513
        %v2549 = vunpack.c.l.b16 %v2516
        %v2550 = vunpack.c.l.b16 %v2520
        %v2551 = vunpack.c.l.b16 %v2523
        %v2552 = vunpack.c.l.b16 %v2527
        %v2553 = vunpack.c.l.b16 %v2530
        %v2554 = vunpack.c.l.b16 %v2534
        %v2555 = vunpack.c.l.b16 %v2537
        %v2556 = vpack.c.b16 %v2541, %v2540
        %v2557 = vpack.c.b16 %v2543, %v2542
        %v2558 = vpack.c.b16 %v2545, %v2544
        %v2559 = vpack.c.b16 %v2547, %v2546
        %v2560 = vpack.c.b16 %v2549, %v2548
        %v2561 = vpack.c.b16 %v2551, %v2550
        %v2562 = vpack.c.b16 %v2553, %v2552
        %v2563 = vpack.c.b16 %v2555, %v2554
        %v2565 = vsel %vm489, %v2556, 0
        %v2568 = vsel %vm489, %v2557, 0
        %v2571 = vsel %vm489, %v2558, 0
        %v2574 = vsel %vm489, %v2559, 0
        %v2577 = vsel %vm489, %v2560, 0
        %v2580 = vsel %vm489, %v2561, 0
        %v2583 = vsel %vm489, %v2562, 0
        %v2586 = vsel %vm489, %v2563, 0
        %v2589 = vsel %vm514, %v2539, 0
        %2591 = vmatprep.subr.bf16.mxu0 0
        %2592 = vmatpush1.bf16.msra.mxu0 %v2589
        %2593 = vmatprep.subr.bf16.mxu0 0
        %2594 = vmatpush1.bf16.msra.mxu0 0
        %2595 = vmatprep.subr.bf16.mxu0 0
        %2596 = vmatpush1.bf16.msra.mxu0 0
        %2597 = vmatprep.subr.bf16.mxu0 0
        %2598 = vmatpush1.bf16.msra.mxu0 0
        %2599 = vmatprep.subr.bf16.mxu0 0
        %2600 = vmatpush1.bf16.msra.mxu0 0
        %2601 = vmatprep.subr.bf16.mxu0 0
        %2602 = vmatpush1.bf16.msra.mxu0 0
        %2603 = vmatprep.subr.bf16.mxu0 0
        %2604 = vmatpush1.bf16.msra.mxu0 0
        %2605 = vmatprep.subr.bf16.mxu0 0
        %2606 = vmatpush1.bf16.msra.mxu0 0
        %2607 = vmatprep.subr.bf16.mxu0 0
        %2608 = vmatpush1.bf16.msra.mxu0 0
        %2609 = vmatprep.subr.bf16.mxu0 0
        %2610 = vmatpush1.bf16.msra.mxu0 0
        %2611 = vmatprep.subr.bf16.mxu0 0
        %2612 = vmatpush1.bf16.msra.mxu0 0
        %2613 = vmatprep.subr.bf16.mxu0 0
        %2614 = vmatpush1.bf16.msra.mxu0 0
        %2615 = vmatprep.subr.bf16.mxu0 0
        %2616 = vmatpush1.bf16.msra.mxu0 0
        %2617 = vmatprep.subr.bf16.mxu0 0
        %2618 = vmatpush1.bf16.msra.mxu0 0
        %2619 = vmatprep.subr.bf16.mxu0 0
        %2620 = vmatpush1.bf16.msra.mxu0 0
        %2621 = vmatprep.subr.bf16.mxu0 0
        %2622 = vmatpush1.bf16.msra.mxu0 0
        %2623 = vmatprep.mubr.bf16.mxu0 0
        %2624 = vmatmul.mubr.bf16.gmra.mrb[0].mxu0 %v2565
        %v2625 = vpop.f32.mrb[0].mxu0
        %v2626 = vadd.f32 0.0, %v2625
        %v2627 = vpop.f32.mrb[0].mxu0
        %v2628 = vpop.f32.mrb[0].mxu0
        %v2629 = vadd.f32 0.0, %v2628
        %v2630 = vpop.f32.mrb[0].mxu0
        %2631 = vmatprep.mubr.bf16.mxu0 0
        %2632 = vmatmul.mubr.bf16.gmra.mrb[0].mxu0 %v2568
        %v2633 = vpop.f32.mrb[0].mxu0
        %v2634 = vadd.f32 0.0, %v2633
        %v2635 = vpop.f32.mrb[0].mxu0
        %v2636 = vpop.f32.mrb[0].mxu0
        %v2637 = vadd.f32 0.0, %v2636
        %v2638 = vpop.f32.mrb[0].mxu0
        %2639 = vmatprep.mubr.bf16.mxu0 0
        %2640 = vmatmul.mubr.bf16.gmra.mrb[0].mxu0 %v2571
        %v2641 = vpop.f32.mrb[0].mxu0
        %v2642 = vadd.f32 0.0, %v2641
        %v2643 = vpop.f32.mrb[0].mxu0
        %v2644 = vpop.f32.mrb[0].mxu0
        %v2645 = vadd.f32 0.0, %v2644
        %v2646 = vpop.f32.mrb[0].mxu0
        %2647 = vmatprep.mubr.bf16.mxu0 0
        %2648 = vmatmul.mubr.bf16.gmra.mrb[0].mxu0 %v2574
        %v2649 = vpop.f32.mrb[0].mxu0
        %v2650 = vadd.f32 0.0, %v2649
        %v2651 = vpop.f32.mrb[0].mxu0
        %v2652 = vpop.f32.mrb[0].mxu0
        %v2653 = vadd.f32 0.0, %v2652
        %v2654 = vpop.f32.mrb[0].mxu0
        %2655 = vmatprep.mubr.bf16.mxu0 0
        %2656 = vmatmul.mubr.bf16.gmra.mrb[0].mxu0 %v2577
        %v2657 = vpop.f32.mrb[0].mxu0
        %v2658 = vadd.f32 0.0, %v2657
        %v2659 = vpop.f32.mrb[0].mxu0
        %v2660 = vpop.f32.mrb[0].mxu0
        %v2661 = vadd.f32 0.0, %v2660
        %v2662 = vpop.f32.mrb[0].mxu0
        %2663 = vmatprep.mubr.bf16.mxu0 0
        %2664 = vmatmul.mubr.bf16.gmra.mrb[0].mxu0 %v2580
        %v2665 = vpop.f32.mrb[0].mxu0
        %v2666 = vadd.f32 0.0, %v2665
        %v2667 = vpop.f32.mrb[0].mxu0
        %v2668 = vpop.f32.mrb[0].mxu0
        %v2669 = vadd.f32 0.0, %v2668
        %v2670 = vpop.f32.mrb[0].mxu0
        %2671 = vmatprep.mubr.bf16.mxu0 0
        %2672 = vmatmul.mubr.bf16.gmra.mrb[0].mxu0 %v2583
        %v2673 = vpop.f32.mrb[0].mxu0
        %v2674 = vadd.f32 0.0, %v2673
        %v2675 = vpop.f32.mrb[0].mxu0
        %v2676 = vpop.f32.mrb[0].mxu0
        %v2677 = vadd.f32 0.0, %v2676
        %v2678 = vpop.f32.mrb[0].mxu0
        %2679 = vmatprep.mubr.bf16.mxu0 0
        %2680 = vmatmul.mubr.bf16.gmra.mrb[0].mxu0 %v2586
        %v2681 = vpop.f32.mrb[0].mxu0
        %v2682 = vadd.f32 0.0, %v2681
        %v2683 = vpop.f32.mrb[0].mxu0
        %v2684 = vpop.f32.mrb[0].mxu0
        %v2685 = vadd.f32 0.0, %v2684
        %v2686 = vpop.f32.mrb[0].mxu0
        %2687 = vdwg.mxu0
        %v2688 = vadd.f32 %v2434, %v2626
        %v2689 = vadd.f32 %v2435, %v2629
        %v2690 = vadd.f32 %v2436, %v2634
        %v2691 = vadd.f32 %v2437, %v2637
        %v2692 = vadd.f32 %v2438, %v2642
        %v2693 = vadd.f32 %v2439, %v2645
        %v2694 = vadd.f32 %v2440, %v2650
        %v2695 = vadd.f32 %v2441, %v2653
        %v2696 = vadd.f32 %v2442, %v2658
        %v2697 = vadd.f32 %v2443, %v2661
        %v2698 = vadd.f32 %v2444, %v2666
        %v2699 = vadd.f32 %v2445, %v2669
        %v2700 = vadd.f32 %v2446, %v2674
        %v2701 = vadd.f32 %v2447, %v2677
        %v2702 = vadd.f32 %v2448, %v2682
        %v2703 = vadd.f32 %v2449, %v2685
        %v2704 = vld [vmem:[%s2] sm:$0x1]
        %v2706 = vlaneseq
        %v2707 = vshrl.u32 %v2706, 7
        %v2708 = vsub.s32 0, %v2707
        %v2709 = vrot.slane %v2704, %v2708
        %v2711 = vmul.f32 %v2688, %v2709
        %v2712 = vmul.f32 %v2689, %v2709
        %v2713 = vmul.f32 %v2690, %v2709
        %v2714 = vmul.f32 %v2691, %v2709
        %v2715 = vmul.f32 %v2692, %v2709
        %v2716 = vmul.f32 %v2693, %v2709
        %v2717 = vmul.f32 %v2694, %v2709
        %v2718 = vmul.f32 %v2695, %v2709
        %v2719 = vmul.f32 %v2696, %v2709
        %v2720 = vmul.f32 %v2697, %v2709
        %v2721 = vmul.f32 %v2698, %v2709
        %v2722 = vmul.f32 %v2699, %v2709
        %v2723 = vmul.f32 %v2700, %v2709
        %v2724 = vmul.f32 %v2701, %v2709
        %v2725 = vmul.f32 %v2702, %v2709
        %v2726 = vmul.f32 %v2703, %v2709
        %v2727 = vld [vmem:[%s3] sm:$0x1]
        %v2729 = vlaneseq
        %v2730 = vshrl.u32 %v2729, 7
        %v2731 = vsub.s32 0, %v2730
        %v2732 = vrot.slane %v2727, %v2731
        %v2734 = vadd.f32 %v2711, %v2732
        %v2735 = vadd.f32 %v2712, %v2732
        %v2736 = vadd.f32 %v2713, %v2732
        %v2737 = vadd.f32 %v2714, %v2732
        %v2738 = vadd.f32 %v2715, %v2732
        %v2739 = vadd.f32 %v2716, %v2732
        %v2740 = vadd.f32 %v2717, %v2732
        %v2741 = vadd.f32 %v2718, %v2732
        %v2742 = vadd.f32 %v2719, %v2732
        %v2743 = vadd.f32 %v2720, %v2732
        %v2744 = vadd.f32 %v2721, %v2732
        %v2745 = vadd.f32 %v2722, %v2732
        %v2746 = vadd.f32 %v2723, %v2732
        %v2747 = vadd.f32 %v2724, %v2732
        %v2748 = vadd.f32 %v2725, %v2732
        %v2749 = vadd.f32 %v2726, %v2732
        %vm2750 = vcmp.ge.f32.partialorder %v2734, 0.0
        %vm2751 = vcmp.ge.f32.partialorder %v2735, 0.0
        %vm2752 = vcmp.ge.f32.partialorder %v2736, 0.0
        %vm2753 = vcmp.ge.f32.partialorder %v2737, 0.0
        %vm2754 = vcmp.ge.f32.partialorder %v2738, 0.0
        %vm2755 = vcmp.ge.f32.partialorder %v2739, 0.0
        %vm2756 = vcmp.ge.f32.partialorder %v2740, 0.0
        %vm2757 = vcmp.ge.f32.partialorder %v2741, 0.0
        %vm2758 = vcmp.ge.f32.partialorder %v2742, 0.0
        %vm2759 = vcmp.ge.f32.partialorder %v2743, 0.0
        %vm2760 = vcmp.ge.f32.partialorder %v2744, 0.0
        %vm2761 = vcmp.ge.f32.partialorder %v2745, 0.0
        %vm2762 = vcmp.ge.f32.partialorder %v2746, 0.0
        %vm2763 = vcmp.ge.f32.partialorder %v2747, 0.0
        %vm2764 = vcmp.ge.f32.partialorder %v2748, 0.0
        %vm2765 = vcmp.ge.f32.partialorder %v2749, 0.0
        %v2766 = vld [vmem:[%s4] sm:$0x1]
        %v2768 = vlaneseq
        %v2769 = vshrl.u32 %v2768, 7
        %v2770 = vsub.s32 0, %v2769
        %v2771 = vrot.slane %v2766, %v2770
        %v2773 = vmul.f32 %v2771, %v2734
        %v2774 = vmul.f32 %v2771, %v2735
        %v2775 = vmul.f32 %v2771, %v2736
        %v2776 = vmul.f32 %v2771, %v2737
        %v2777 = vmul.f32 %v2771, %v2738
        %v2778 = vmul.f32 %v2771, %v2739
        %v2779 = vmul.f32 %v2771, %v2740
        %v2780 = vmul.f32 %v2771, %v2741
        %v2781 = vmul.f32 %v2771, %v2742
        %v2782 = vmul.f32 %v2771, %v2743
        %v2783 = vmul.f32 %v2771, %v2744
        %v2784 = vmul.f32 %v2771, %v2745
        %v2785 = vmul.f32 %v2771, %v2746
        %v2786 = vmul.f32 %v2771, %v2747
        %v2787 = vmul.f32 %v2771, %v2748
        %v2788 = vmul.f32 %v2771, %v2749
        %v2789 = vsel %vm2750, %v2734, %v2773
        %v2790 = vsel %vm2751, %v2735, %v2774
        %v2791 = vsel %vm2752, %v2736, %v2775
        %v2792 = vsel %vm2753, %v2737, %v2776
        %v2793 = vsel %vm2754, %v2738, %v2777
        %v2794 = vsel %vm2755, %v2739, %v2778
        %v2795 = vsel %vm2756, %v2740, %v2779
        %v2796 = vsel %vm2757, %v2741, %v2780
        %v2797 = vsel %vm2758, %v2742, %v2781
        %v2798 = vsel %vm2759, %v2743, %v2782
        %v2799 = vsel %vm2760, %v2744, %v2783
        %v2800 = vsel %vm2761, %v2745, %v2784
        %v2801 = vsel %vm2762, %v2746, %v2785
        %v2802 = vsel %vm2763, %v2747, %v2786
        %v2803 = vsel %vm2764, %v2748, %v2787
        %v2804 = vsel %vm2765, %v2749, %v2788
        %2805 = vst [vmem:[%s231] sm:$0xff] %v2789
        %2806 = vst [vmem:[%s231 + $0x8] sm:$0xff] %v2790
        %2807 = vst [vmem:[%s231 + $0x10] sm:$0xff] %v2791
        %2808 = vst [vmem:[%s231 + $0x18] sm:$0xff] %v2792
        %2809 = vst [vmem:[%s231 + $0x20] sm:$0xff] %v2793
        %2810 = vst [vmem:[%s231 + $0x28] sm:$0xff] %v2794
        %2811 = vst [vmem:[%s231 + $0x30] sm:$0xff] %v2795
        %2812 = vst [vmem:[%s231 + $0x38] sm:$0xff] %v2796
        %2813 = vst [vmem:[%s231 + $0x40] sm:$0xff] %v2797
        %2814 = vst [vmem:[%s231 + $0x48] sm:$0xff] %v2798
        %2815 = vst [vmem:[%s231 + $0x50] sm:$0xff] %v2799
        %2816 = vst [vmem:[%s231 + $0x58] sm:$0xff] %v2800
        %2817 = vst [vmem:[%s231 + $0x60] sm:$0xff] %v2801
        %2818 = vst [vmem:[%s231 + $0x68] sm:$0xff] %v2802
        %2819 = vst [vmem:[%s231 + $0x70] sm:$0xff] %v2803
        %2820 = vst [vmem:[%s231 + $0x78] sm:$0xff] %v2804
        %s2821 = sand.u32 %s151, 1
        %s2822 = scalar_lea.sflag [#allocation3], %s2821
        %s2823 = sand.u32 %s151, 1
        %s2824 = smul.addr %s2823, 128
        %s2825 = scalar_lea.vmem [#allocation2], %s2824
        // Predicated region
        $region41: #{tpu_custom_call.1} parent=39 // pred_check
          %p2826 = pneg %p161
        $region42: #{tpu_custom_call.1} parent=39 // pred_check_branch
          %2828 = sbr.rel (%p2826) target = $region44
        $region43: #{tpu_custom_call.1} parent=39 // pred_region
          %s2829 = smul.u32 8, %s24
          %s2831 = ssub.s32 2048, 2048
          %2832 = vsyncadd %s2822, %s2831
          %s2833 = smul.addr %s2829, 2
          %s2834 = smul.addr %s23, 32
          %s2835 = sadd.s32 %s2833, %s2834
          %s2836 = smul.addr %s2835, 128
          %s2837 = scalar_lea.hbm %s5, %s2836
          %s2838 = sshll.u32 %s2825, 4
          %s2839 = int_to_ptr.vmem [resolvable:$true] %s2838
          %2844 = dma.vmem_to_hbm [thread:$0]  %s2839, 2048, %s2837, %s2822, 128, 128, 8
        $region44: #{tpu_custom_call.1} parent=39 // pred_fallthru
          _
      $region40: #{tpu_custom_call.1} parent=5 // pred_fallthru
        _
      %p2845 = scmp.le.s32.totalorder 2, %s14
      // Predicated region
      $region45: #{tpu_custom_call.1} parent=5 // pred_check
        %p2846 = pneg %p2845
      $region46: #{tpu_custom_call.1} parent=5 // pred_check_branch
        %2848 = sbr.rel (%p2846) target = $region48
      $region47: #{tpu_custom_call.1} parent=5 // pred_region
        %s2849 = ssub.s32 %s14, 2
        // Predicated region
        $region49: #{tpu_custom_call.1} parent=47 // pred_check
          %p2850 = pneg %p167
        $region50: #{tpu_custom_call.1} parent=47 // pred_check_branch
          %2852 = sbr.rel (%p2850) target = $region52
        $region51: #{tpu_custom_call.1} parent=47 // pred_region
          %s2853 = sand.u32 %s152, 1
          %s2854 = scalar_lea.sflag [#allocation3], %s2853
          %s2855 = sand.u32 %s152, 1
          %s2856 = smul.addr %s2855, 128
          %s2857 = scalar_lea.vmem [#allocation2], %s2856
          %2858 = dma.done %s2854, 2048
        $region52: #{tpu_custom_call.1} parent=47 // pred_fallthru
          _
      $region48: #{tpu_custom_call.1} parent=5 // pred_fallthru
        _
    $region6: #{tpu_custom_call.1} parent=1 // loop_footer
      %s18 = sadd.s32 1, %s14
    $region7: #{tpu_custom_call.1} parent=1 // loop_footer_branch
      %13 = sbr.rel target = $region3
    $region8: #{tpu_custom_call.1} parent=1 // loop_exit
      _
    %2859 = vsyncpa [#allocation3], 1
    %s2860 = scalar_lea.sflag [#allocation3], 1
    %2861 = vsyncpa %s2860, 1

</llo_original>
